<compile_context>
chip_gen: v6e
topology: v6e:2x2x1
jax: 0.10.0
libtpu: 0.0.40
codegen_flags: <defaults>
</compile_context>

<pallas_src>
import jax
import jax.numpy as jnp
import numpy as np
from jax.experimental import pallas as pl
from jax.experimental.pallas import tpu as pltpu


def _round_up(x, m):
    return ((x + m - 1) // m) * m


def imb_kernel(ids_ref, tab_ref, bias_ref, out_ref, hot_ref):
    """ids_ref:  (L, TB) int32   -- token ids, batch on the lane axis
       tab_ref:  (C, K)  bf16    -- Linear folded into the embedding table, K = L*vp
       bias_ref: (C, 1)  f32     -- fc bias (added post-matmul, exact f32)
       out_ref:  (C, TB) f32     -- log-probs, classes on sublanes, batch on lanes
       hot_ref:  (K, TB) bf16    -- VMEM scratch holding the one-hot (built stripe-wise)
    """
    L, TB = ids_ref.shape
    C, K = tab_ref.shape
    vp = K // L

    # Per-stripe sublane iota, built ONCE and reused for all L positions.
    viota = jax.lax.broadcasted_iota(jnp.int32, (vp, TB), 0)

    # Stripe-wise one-hot: each position only touches its own 128-sublane stripe.
    # ids_ref[l:l+1, :] is a cheap sublane broadcast of one id row across vp sublanes.
    for l in range(L):
        stripe = (viota == ids_ref[l:l + 1, :]).astype(jnp.bfloat16)   # (vp, TB)
        hot_ref[l * vp:(l + 1) * vp, :] = stripe

    # Single MXU matmul, bf16 inputs, f32 accumulation: (C, K) @ (K, TB) -> (C, TB).
    logits = jnp.dot(tab_ref[...], hot_ref[...],
                     preferred_element_type=jnp.float32)
    logits = logits + bias_ref[...]                                    # exact f32 bias

    # Numerically-stable log_softmax over the class (sublane) axis.
    m = jnp.max(logits, axis=0, keepdims=True)
    lse = m + jnp.log(jnp.sum(jnp.exp(logits - m), axis=0, keepdims=True))
    out_ref[...] = logits - lse


def imb_forward(ids, emb_table, fc_weight, fc_bias, *, block_b=512):
    """ids: (B, L) int   emb_table: (V, D)   fc_weight: (C, L*D)   fc_bias: (C,)"""
    B, L = ids.shape
    V, D = emb_table.shape
    C = fc_weight.shape[0]                                             # 2 classes

    # ---- batch-independent parameter fold (plain JAX, outside the kernel) ----
    # PyTorch flatten order (B, L, D) -> (B, L*D) is [l*D + d], so W[c, l*D+d] -> w3[c, l, d].
    w3 = fc_weight.reshape(C, L, D).astype(jnp.float32)
    tT = jnp.einsum('vd,cld->clv', emb_table.astype(jnp.float32), w3)  # (C, L, V)

    # Pad the vocab axis to a full lane group so each position's stripe is one
    # clean 128-lane-group slab; padded vocab slots are zero columns of the table.
    vp = _round_up(V, 128)
    tab = jnp.zeros((C, L, vp), jnp.float32).at[:, :, :V].set(tT)
    tab = tab.reshape(C, L * vp).astype(jnp.bfloat16)                  # (C, K) lane-dense
    K = L * vp

    bias2 = fc_bias.reshape(C, 1).astype(jnp.float32)                  # (C, 1) f32

    # ---- batch tiling: batch on the 128-lane axis ----
    if B <= block_b:
        tb = B                            # single full block (legal: block == array dims)
    else:
        # >= 2 grid steps, 128-lane aligned blocks (keeps both v7x TCs busy; big
        # enough to amortize per-step overhead on v5e/v6e).
        tb = min(block_b, _round_up((B + 1) // 2, 128))
    bp = _round_up(B, tb)

    ids_t = ids.astype(jnp.int32).T                                    # (L, B)
    if bp != B:
        ids_t = jnp.pad(ids_t, ((0, 0), (0, bp - B)))                  # padded cols sliced off below

    out_t = pl.pallas_call(
        imb_kernel,
        out_shape=jax.ShapeDtypeStruct((C, bp), jnp.float32),
        grid=(bp // tb,),
        in_specs=[
            pl.BlockSpec((L, tb), lambda i: (0, i)),   # token-id tile (batch on lanes)
            pl.BlockSpec((C, K), lambda i: (0, 0)),    # folded (Linear ∘ embedding) table
            pl.BlockSpec((C, 1), lambda i: (0, 0)),    # fc bias (f32)
        ],
        out_specs=pl.BlockSpec((C, tb), lambda i: (0, i)),
        scratch_shapes=[pltpu.VMEM((K, tb), jnp.bfloat16)],            # one-hot scratch
        compiler_params=pltpu.CompilerParams(dimension_semantics=("parallel",)),
    )(ids_t, tab, bias2)

    return out_t[:, :B].T                                              # (B, C)


def reference_forward(ids, emb_table, fc_weight, fc_bias):
    """Pure-JAX f32 reference mirroring the PyTorch module."""
    B, L = ids.shape
    x = jnp.take(emb_table, ids, axis=0)                 # (B, L, D)
    x = x.reshape(B, -1)                                 # (B, L*D)
    out = x @ fc_weight.T + fc_bias                      # (B, 2)
    return jax.nn.log_softmax(out, axis=-1)


if __name__ == "__main__":
    # Small, forward-consistent shapes: vocab V=50 (stands in for len(config.ws)),
    # embedding_dim D=200 (as in the module), max_len L=8, batch B=2, PAD=0.
    V, D, L, B = 50, 200, 8, 2
    PAD = 0

    key = jax.random.PRNGKey(0)
    k_emb, k_w, k_b, k_ids = jax.random.split(key, 4)

    emb_table = 0.1 * jax.random.normal(k_emb, (V, D), dtype=jnp.float32)
    emb_table = emb_table.at[PAD].set(0.0)      # padding_idx row zeroed (PyTorch init)
    fc_weight = 0.05 * jax.random.normal(k_w, (2, L * D), dtype=jnp.float32)
    fc_bias = 0.05 * jax.random.normal(k_b, (2,), dtype=jnp.float32)

    ids = jax.random.randint(k_ids, (B, L), 0, V, dtype=jnp.int32)

    out = imb_forward(ids, emb_table, fc_weight, fc_bias)
    out = jax.block_until_ready(out)

    ref = reference_forward(ids, emb_table, fc_weight, fc_bias)
    # bf16 folded table (f32 accumulation, f32 bias post-add) vs f32 reference.
    np.testing.assert_allclose(np.asarray(out), np.asarray(ref), rtol=2e-2, atol=2e-2)

    print("KERNEL_OK")
</pallas_src>

<mosaic_0001>
module attributes {stable_mosaic.version = 11 : i64} {
  func.func @imb_kernel(%arg0: i32, %arg1: memref<8x2xi32, #tpu.memory_space<vmem>>, %arg2: memref<2x1024xbf16, #tpu.memory_space<vmem>>, %arg3: memref<2x1xf32, #tpu.memory_space<vmem>>, %arg4: memref<2x2xf32, #tpu.memory_space<vmem>>, %arg5: memref<1024x2xbf16, #tpu.memory_space<vmem>>) attributes {dimension_semantics = [#tpu.dimension_semantics<parallel>], iteration_bounds = array<i64: 1>, scalar_prefetch = 0 : i64, scratch_operands = 1 : i64, tpu.core_type = #tpu.core_type<tc>, window_params = [{transform_indices = @transform_0, window_bounds = array<i64: 8, 2>}, {pipeline_mode = #tpu.pipeline_mode<synchronous>, transform_indices = @transform_1, window_bounds = array<i64: 2, 1024>}, {pipeline_mode = #tpu.pipeline_mode<synchronous>, transform_indices = @transform_2, window_bounds = array<i64: 2, 1>}, {transform_indices = @transform_3, window_bounds = array<i64: 2, 2>}]} {
    %0 = tpu.iota {dimensions = array<i32: 0>} : vector<128x2xi32>
    %c0 = arith.constant 0 : index
    %c0_0 = arith.constant 0 : index
    %1 = vector.load %arg1[%c0, %c0_0] : memref<8x2xi32, #tpu.memory_space<vmem>>, vector<1x2xi32>
    %2 = vector.broadcast %1 : vector<1x2xi32> to vector<128x2xi32>
    %3 = arith.cmpi eq, %0, %2 : vector<128x2xi32>
    %4 = arith.extui %3 : vector<128x2xi1> to vector<128x2xi32>
    %5 = arith.sitofp %4 : vector<128x2xi32> to vector<128x2xf32>
    %6 = arith.truncf %5 : vector<128x2xf32> to vector<128x2xbf16>
    %c0_1 = arith.constant 0 : index
    %c0_2 = arith.constant 0 : index
    %7 = vector.load %arg5[%c0_1, %c0_2] : memref<1024x2xbf16, #tpu.memory_space<vmem>>, vector<128x2xbf16>
    tpu.vector_store %arg5[%c0_1, %c0_2], %6 {strides = array<i32>} : memref<1024x2xbf16, #tpu.memory_space<vmem>>, vector<128x2xbf16>,
    %c1 = arith.constant 1 : index
    %c0_3 = arith.constant 0 : index
    %8 = vector.load %arg1[%c1, %c0_3] : memref<8x2xi32, #tpu.memory_space<vmem>>, vector<1x2xi32>
    %9 = vector.broadcast %8 : vector<1x2xi32> to vector<128x2xi32>
    %10 = arith.cmpi eq, %0, %9 : vector<128x2xi32>
    %11 = arith.extui %10 : vector<128x2xi1> to vector<128x2xi32>
    %12 = arith.sitofp %11 : vector<128x2xi32> to vector<128x2xf32>
    %13 = arith.truncf %12 : vector<128x2xf32> to vector<128x2xbf16>
    %c128 = arith.constant 128 : index
    %c0_4 = arith.constant 0 : index
    %14 = vector.load %arg5[%c128, %c0_4] : memref<1024x2xbf16, #tpu.memory_space<vmem>>, vector<128x2xbf16>
    tpu.vector_store %arg5[%c128, %c0_4], %13 {strides = array<i32>} : memref<1024x2xbf16, #tpu.memory_space<vmem>>, vector<128x2xbf16>,
    %c2 = arith.constant 2 : index
    %c0_5 = arith.constant 0 : index
    %15 = vector.load %arg1[%c2, %c0_5] : memref<8x2xi32, #tpu.memory_space<vmem>>, vector<1x2xi32>
    %16 = vector.broadcast %15 : vector<1x2xi32> to vector<128x2xi32>
    %17 = arith.cmpi eq, %0, %16 : vector<128x2xi32>
    %18 = arith.extui %17 : vector<128x2xi1> to vector<128x2xi32>
    %19 = arith.sitofp %18 : vector<128x2xi32> to vector<128x2xf32>
    %20 = arith.truncf %19 : vector<128x2xf32> to vector<128x2xbf16>
    %c256 = arith.constant 256 : index
    %c0_6 = arith.constant 0 : index
    %21 = vector.load %arg5[%c256, %c0_6] : memref<1024x2xbf16, #tpu.memory_space<vmem>>, vector<128x2xbf16>
    tpu.vector_store %arg5[%c256, %c0_6], %20 {strides = array<i32>} : memref<1024x2xbf16, #tpu.memory_space<vmem>>, vector<128x2xbf16>,
    %c3 = arith.constant 3 : index
    %c0_7 = arith.constant 0 : index
    %22 = vector.load %arg1[%c3, %c0_7] : memref<8x2xi32, #tpu.memory_space<vmem>>, vector<1x2xi32>
    %23 = vector.broadcast %22 : vector<1x2xi32> to vector<128x2xi32>
    %24 = arith.cmpi eq, %0, %23 : vector<128x2xi32>
    %25 = arith.extui %24 : vector<128x2xi1> to vector<128x2xi32>
    %26 = arith.sitofp %25 : vector<128x2xi32> to vector<128x2xf32>
    %27 = arith.truncf %26 : vector<128x2xf32> to vector<128x2xbf16>
    %c384 = arith.constant 384 : index
    %c0_8 = arith.constant 0 : index
    %28 = vector.load %arg5[%c384, %c0_8] : memref<1024x2xbf16, #tpu.memory_space<vmem>>, vector<128x2xbf16>
    tpu.vector_store %arg5[%c384, %c0_8], %27 {strides = array<i32>} : memref<1024x2xbf16, #tpu.memory_space<vmem>>, vector<128x2xbf16>,
    %c4 = arith.constant 4 : index
    %c0_9 = arith.constant 0 : index
    %29 = vector.load %arg1[%c4, %c0_9] : memref<8x2xi32, #tpu.memory_space<vmem>>, vector<1x2xi32>
    %30 = vector.broadcast %29 : vector<1x2xi32> to vector<128x2xi32>
    %31 = arith.cmpi eq, %0, %30 : vector<128x2xi32>
    %32 = arith.extui %31 : vector<128x2xi1> to vector<128x2xi32>
    %33 = arith.sitofp %32 : vector<128x2xi32> to vector<128x2xf32>
    %34 = arith.truncf %33 : vector<128x2xf32> to vector<128x2xbf16>
    %c512 = arith.constant 512 : index
    %c0_10 = arith.constant 0 : index
    %35 = vector.load %arg5[%c512, %c0_10] : memref<1024x2xbf16, #tpu.memory_space<vmem>>, vector<128x2xbf16>
    tpu.vector_store %arg5[%c512, %c0_10], %34 {strides = array<i32>} : memref<1024x2xbf16, #tpu.memory_space<vmem>>, vector<128x2xbf16>,
    %c5 = arith.constant 5 : index
    %c0_11 = arith.constant 0 : index
    %36 = vector.load %arg1[%c5, %c0_11] : memref<8x2xi32, #tpu.memory_space<vmem>>, vector<1x2xi32>
    %37 = vector.broadcast %36 : vector<1x2xi32> to vector<128x2xi32>
    %38 = arith.cmpi eq, %0, %37 : vector<128x2xi32>
    %39 = arith.extui %38 : vector<128x2xi1> to vector<128x2xi32>
    %40 = arith.sitofp %39 : vector<128x2xi32> to vector<128x2xf32>
    %41 = arith.truncf %40 : vector<128x2xf32> to vector<128x2xbf16>
    %c640 = arith.constant 640 : index
    %c0_12 = arith.constant 0 : index
    %42 = vector.load %arg5[%c640, %c0_12] : memref<1024x2xbf16, #tpu.memory_space<vmem>>, vector<128x2xbf16>
    tpu.vector_store %arg5[%c640, %c0_12], %41 {strides = array<i32>} : memref<1024x2xbf16, #tpu.memory_space<vmem>>, vector<128x2xbf16>,
    %c6 = arith.constant 6 : index
    %c0_13 = arith.constant 0 : index
    %43 = vector.load %arg1[%c6, %c0_13] : memref<8x2xi32, #tpu.memory_space<vmem>>, vector<1x2xi32>
    %44 = vector.broadcast %43 : vector<1x2xi32> to vector<128x2xi32>
    %45 = arith.cmpi eq, %0, %44 : vector<128x2xi32>
    %46 = arith.extui %45 : vector<128x2xi1> to vector<128x2xi32>
    %47 = arith.sitofp %46 : vector<128x2xi32> to vector<128x2xf32>
    %48 = arith.truncf %47 : vector<128x2xf32> to vector<128x2xbf16>
    %c768 = arith.constant 768 : index
    %c0_14 = arith.constant 0 : index
    %49 = vector.load %arg5[%c768, %c0_14] : memref<1024x2xbf16, #tpu.memory_space<vmem>>, vector<128x2xbf16>
    tpu.vector_store %arg5[%c768, %c0_14], %48 {strides = array<i32>} : memref<1024x2xbf16, #tpu.memory_space<vmem>>, vector<128x2xbf16>,
    %c7 = arith.constant 7 : index
    %c0_15 = arith.constant 0 : index
    %50 = vector.load %arg1[%c7, %c0_15] : memref<8x2xi32, #tpu.memory_space<vmem>>, vector<1x2xi32>
    %51 = vector.broadcast %50 : vector<1x2xi32> to vector<128x2xi32>
    %52 = arith.cmpi eq, %0, %51 : vector<128x2xi32>
    %53 = arith.extui %52 : vector<128x2xi1> to vector<128x2xi32>
    %54 = arith.sitofp %53 : vector<128x2xi32> to vector<128x2xf32>
    %55 = arith.truncf %54 : vector<128x2xf32> to vector<128x2xbf16>
    %c896 = arith.constant 896 : index
    %c0_16 = arith.constant 0 : index
    %56 = vector.load %arg5[%c896, %c0_16] : memref<1024x2xbf16, #tpu.memory_space<vmem>>, vector<128x2xbf16>
    tpu.vector_store %arg5[%c896, %c0_16], %55 {strides = array<i32>} : memref<1024x2xbf16, #tpu.memory_space<vmem>>, vector<128x2xbf16>,
    %c0_17 = arith.constant 0 : index
    %c0_18 = arith.constant 0 : index
    %57 = vector.load %arg2[%c0_17, %c0_18] : memref<2x1024xbf16, #tpu.memory_space<vmem>>, vector<2x1024xbf16>
    %c0_19 = arith.constant 0 : index
    %c0_20 = arith.constant 0 : index
    %58 = vector.load %arg5[%c0_19, %c0_20] : memref<1024x2xbf16, #tpu.memory_space<vmem>>, vector<1024x2xbf16>
    %cst = arith.constant dense<0.000000e+00> : vector<2x2xf32>
    %59 = tpu.matmul %57, %58, %cst {dimension_numbers = #tpu.dot_dimension_numbers<[1], [0], [0], [1], [0, 0, 1, 1], [], []>} : vector<2x1024xbf16>, vector<1024x2xbf16>, vector<2x2xf32> -> vector<2x2xf32>
    %c0_21 = arith.constant 0 : index
    %c0_22 = arith.constant 0 : index
    %60 = vector.load %arg3[%c0_21, %c0_22] : memref<2x1xf32, #tpu.memory_space<vmem>>, vector<2x1xf32>
    %61 = vector.broadcast %60 : vector<2x1xf32> to vector<2x2xf32>
    %62 = arith.addf %59, %61 : vector<2x2xf32>
    %cst_23 = arith.constant dense<0xFF800000> : vector<2xf32>
    %63 = vector.multi_reduction <maximumf>, %62, %cst_23 [0] : vector<2x2xf32> to vector<2xf32>
    %64 = vector.shape_cast %63 : vector<2xf32> to vector<1x2xf32>
    %65 = vector.broadcast %64 : vector<1x2xf32> to vector<2x2xf32>
    %66 = arith.subf %62, %65 : vector<2x2xf32>
    %67 = math.exp %66 : vector<2x2xf32>
    %cst_24 = arith.constant dense<0.000000e+00> : vector<2xf32>
    %68 = vector.multi_reduction <add>, %67, %cst_24 [0] : vector<2x2xf32> to vector<2xf32>
    %69 = vector.shape_cast %68 : vector<2xf32> to vector<1x2xf32>
    %70 = math.log %69 : vector<1x2xf32>
    %71 = arith.addf %64, %70 : vector<1x2xf32>
    %72 = vector.broadcast %71 : vector<1x2xf32> to vector<2x2xf32>
    %73 = arith.subf %62, %72 : vector<2x2xf32>
    %c0_25 = arith.constant 0 : index
    %c0_26 = arith.constant 0 : index
    %74 = vector.load %arg4[%c0_25, %c0_26] : memref<2x2xf32, #tpu.memory_space<vmem>>, vector<2x2xf32>
    tpu.vector_store %arg4[%c0_25, %c0_26], %73 {strides = array<i32>} : memref<2x2xf32, #tpu.memory_space<vmem>>, vector<2x2xf32>,
    return
  }
  func.func @transform_0(%arg0: i32) -> (i32, i32) {
    %c0_i32 = arith.constant 0 : i32
    %c0_i32_0 = arith.constant 0 : i32
    return %c0_i32, %arg0 : i32, i32
  }
  func.func @transform_1(%arg0: i32) -> (i32, i32) {
    %c0_i32 = arith.constant 0 : i32
    %c0_i32_0 = arith.constant 0 : i32
    %c0_i32_1 = arith.constant 0 : i32
    return %c0_i32, %c0_i32_0 : i32, i32
  }
  func.func @transform_2(%arg0: i32) -> (i32, i32) {
    %c0_i32 = arith.constant 0 : i32
    %c0_i32_0 = arith.constant 0 : i32
    %c0_i32_1 = arith.constant 0 : i32
    return %c0_i32, %c0_i32_0 : i32, i32
  }
  func.func @transform_3(%arg0: i32) -> (i32, i32) {
    %c0_i32 = arith.constant 0 : i32
    %c0_i32_0 = arith.constant 0 : i32
    return %c0_i32, %arg0 : i32, i32
  }
}

</mosaic_0001>

<llo_original>
// kernel: tpu_custom_call.1
$region0: #{tpu_custom_call.1}
  #allocation0 [shape = 'u32[]', space=smem, size = 0x4, offset = 0x4, fixed_abs, tag = 'smem constant byte address 0x4 - core index']
  #allocation1 [shape = 'u32[144,128]{1,0:T(1,128)}', space=vmem, size = 0x12000, scoped, tag = 'internal scratch']
  #allocation2 [shape = 'bf16[1024,2]{1,0:T(8,128)(2,1)}', space=vmem, size = 0x40000, scoped, tag = 'scratch operand']
  %s0 = inlined_call_operand.vmem [shape: s32[8,2], index: 0, kind: input, shape index: {}]
  %s1 = inlined_call_operand.vmem [shape: bf16[2,1024], index: 1, kind: input, shape index: {}]
  %s2 = inlined_call_operand.vmem [shape: f32[2,1], index: 2, kind: input, shape index: {}]
  %s3 = inlined_call_operand.hbm [shape: f32[2,2], index: 3, kind: output, shape index: {}]
  %s4 = sld [smem:[#allocation0]]
  $region22: #{tpu_custom_call.1} parent=0
    _
  %s6 = ssub.s32 1, %s4
  %s7 = scalar_select 0, %s6, %s4
  $region1: #{tpu_custom_call.1} parent=0
    #allocation3 [shape = 'u8[1024]{0}', space=vmem, size = 0x400, scoped, tag = 'output window, operand 0, single buffered']
    #allocation4 [shape = 's32[1]{0}', space=sflag, size = 0x4, scoped, tag = 'scoped memory for tpu_custom_call.1']
    %8 = vsyncpa [#allocation4], 0
    // Predicated region
    $region2: #{tpu_custom_call.1} parent=1 // pred_check
      _
    $region3: #{tpu_custom_call.1} parent=1 // pred_check_branch
      %10 = sbr.rel (0) target = $region5
    $region4: #{tpu_custom_call.1} parent=1 // pred_region
      _
    $region5: #{tpu_custom_call.1} parent=1 // pred_fallthru
      _
    // Predicated region
    $region6: #{tpu_custom_call.1} parent=1 // pred_check
      _
    $region7: #{tpu_custom_call.1} parent=1 // pred_check_branch
      %12 = sbr.rel (0) target = $region9
    $region8: #{tpu_custom_call.1} parent=1 // pred_region
      _
    $region9: #{tpu_custom_call.1} parent=1 // pred_fallthru
      _
    // Predicated region
    $region10: #{tpu_custom_call.1} parent=1 // pred_check
      _
    $region11: #{tpu_custom_call.1} parent=1 // pred_check_branch
      %14 = sbr.rel (0) target = $region13
    $region12: #{tpu_custom_call.1} parent=1 // pred_region
      _
    $region13: #{tpu_custom_call.1} parent=1 // pred_fallthru
      _
    %v16 = vlaneseq
    %v17 = vshrl.u32 %v16, 7
    %v18 = vadd.s32 %v17, 8
    %v19 = vadd.s32 %v17, 16
    %v20 = vadd.s32 %v17, 24
    %v21 = vadd.s32 %v17, 32
    %v22 = vadd.s32 %v17, 40
    %v23 = vadd.s32 %v17, 48
    %v24 = vadd.s32 %v17, 56
    %v25 = vadd.s32 %v17, 64
    %v26 = vadd.s32 %v17, 72
    %v27 = vadd.s32 %v17, 80
    %v28 = vadd.s32 %v17, 88
    %v29 = vadd.s32 %v17, 96
    %v30 = vadd.s32 %v17, 104
    %v31 = vadd.s32 %v17, 112
    %v32 = vadd.s32 %v17, 120
    %v33 = vld [vmem:[%s0] sm:$0x1]
    %v34 = vlaneseq
    %v35 = vshrl.u32 %v34, 7
    %v36 = vsub.s32 0, %v35
    %v37 = vrot.slane %v33, %v36
    %vm38 = vcmp.eq.s32.totalorder %v17, %v37
    %vm39 = vcmp.eq.s32.totalorder %v18, %v37
    %vm40 = vcmp.eq.s32.totalorder %v19, %v37
    %vm41 = vcmp.eq.s32.totalorder %v20, %v37
    %vm42 = vcmp.eq.s32.totalorder %v21, %v37
    %vm43 = vcmp.eq.s32.totalorder %v22, %v37
    %vm44 = vcmp.eq.s32.totalorder %v23, %v37
    %vm45 = vcmp.eq.s32.totalorder %v24, %v37
    %vm46 = vcmp.eq.s32.totalorder %v25, %v37
    %vm47 = vcmp.eq.s32.totalorder %v26, %v37
    %vm48 = vcmp.eq.s32.totalorder %v27, %v37
    %vm49 = vcmp.eq.s32.totalorder %v28, %v37
    %vm50 = vcmp.eq.s32.totalorder %v29, %v37
    %vm51 = vcmp.eq.s32.totalorder %v30, %v37
    %vm52 = vcmp.eq.s32.totalorder %v31, %v37
    %vm53 = vcmp.eq.s32.totalorder %v32, %v37
    %v54 = vsel %vm38, 1, 0
    %v55 = vsel %vm39, 1, 0
    %v56 = vsel %vm40, 1, 0
    %v57 = vsel %vm41, 1, 0
    %v58 = vsel %vm42, 1, 0
    %v59 = vsel %vm43, 1, 0
    %v60 = vsel %vm44, 1, 0
    %v61 = vsel %vm45, 1, 0
    %v62 = vsel %vm46, 1, 0
    %v63 = vsel %vm47, 1, 0
    %v64 = vsel %vm48, 1, 0
    %v65 = vsel %vm49, 1, 0
    %v66 = vsel %vm50, 1, 0
    %v67 = vsel %vm51, 1, 0
    %v68 = vsel %vm52, 1, 0
    %v69 = vsel %vm53, 1, 0
    %v70 = vcvt.s32.f32 %v54
    %v71 = vcvt.s32.f32 %v55
    %v72 = vcvt.s32.f32 %v56
    %v73 = vcvt.s32.f32 %v57
    %v74 = vcvt.s32.f32 %v58
    %v75 = vcvt.s32.f32 %v59
    %v76 = vcvt.s32.f32 %v60
    %v77 = vcvt.s32.f32 %v61
    %v78 = vcvt.s32.f32 %v62
    %v79 = vcvt.s32.f32 %v63
    %v80 = vcvt.s32.f32 %v64
    %v81 = vcvt.s32.f32 %v65
    %v82 = vcvt.s32.f32 %v66
    %v83 = vcvt.s32.f32 %v67
    %v84 = vcvt.s32.f32 %v68
    %v85 = vcvt.s32.f32 %v69
    %v86 = vpack.c.bf16 %v71, %v70
    %v87 = vpack.c.bf16 %v73, %v72
    %v88 = vpack.c.bf16 %v75, %v74
    %v89 = vpack.c.bf16 %v77, %v76
    %v90 = vpack.c.bf16 %v79, %v78
    %v91 = vpack.c.bf16 %v81, %v80
    %v92 = vpack.c.bf16 %v83, %v82
    %v93 = vpack.c.bf16 %v85, %v84
    %v102 = vunpack.c.l.b16 %v86
    %v103 = vunpack.c.h.b16 %v86
    %v104 = vunpack.c.l.b16 %v87
    %v105 = vunpack.c.h.b16 %v87
    %v106 = vunpack.c.l.b16 %v88
    %v107 = vunpack.c.h.b16 %v88
    %v108 = vunpack.c.l.b16 %v89
    %v109 = vunpack.c.h.b16 %v89
    %v110 = vunpack.c.l.b16 %v90
    %v111 = vunpack.c.h.b16 %v90
    %v112 = vunpack.c.l.b16 %v91
    %v113 = vunpack.c.h.b16 %v91
    %v114 = vunpack.c.l.b16 %v92
    %v115 = vunpack.c.h.b16 %v92
    %v116 = vunpack.c.l.b16 %v93
    %v117 = vunpack.c.h.b16 %v93
    %v118 = vpack.c.b16 %v102, %v102
    %v119 = vpack.c.b16 %v103, %v103
    %v120 = vpack.c.b16 %v104, %v104
    %v121 = vpack.c.b16 %v105, %v105
    %v122 = vpack.c.b16 %v106, %v106
    %v123 = vpack.c.b16 %v107, %v107
    %v124 = vpack.c.b16 %v108, %v108
    %v125 = vpack.c.b16 %v109, %v109
    %v126 = vpack.c.b16 %v110, %v110
    %v127 = vpack.c.b16 %v111, %v111
    %v128 = vpack.c.b16 %v112, %v112
    %v129 = vpack.c.b16 %v113, %v113
    %v130 = vpack.c.b16 %v114, %v114
    %v131 = vpack.c.b16 %v115, %v115
    %v132 = vpack.c.b16 %v116, %v116
    %v133 = vpack.c.b16 %v117, %v117
    %vm150 = vcmask 11264
    %151 = vst.msk [vmem:[#allocation2] sm:$0xf] %vm150, %v118
    %152 = vst.msk [vmem:[#allocation2 + $0x4] sm:$0xf] %vm150, %v119
    %153 = vst.msk [vmem:[#allocation2 + $0x8] sm:$0xf] %vm150, %v120
    %154 = vst.msk [vmem:[#allocation2 + $0xc] sm:$0xf] %vm150, %v121
    %155 = vst.msk [vmem:[#allocation2 + $0x10] sm:$0xf] %vm150, %v122
    %156 = vst.msk [vmem:[#allocation2 + $0x14] sm:$0xf] %vm150, %v123
    %157 = vst.msk [vmem:[#allocation2 + $0x18] sm:$0xf] %vm150, %v124
    %158 = vst.msk [vmem:[#allocation2 + $0x1c] sm:$0xf] %vm150, %v125
    %159 = vst.msk [vmem:[#allocation2 + $0x20] sm:$0xf] %vm150, %v126
    %160 = vst.msk [vmem:[#allocation2 + $0x24] sm:$0xf] %vm150, %v127
    %161 = vst.msk [vmem:[#allocation2 + $0x28] sm:$0xf] %vm150, %v128
    %162 = vst.msk [vmem:[#allocation2 + $0x2c] sm:$0xf] %vm150, %v129
    %163 = vst.msk [vmem:[#allocation2 + $0x30] sm:$0xf] %vm150, %v130
    %164 = vst.msk [vmem:[#allocation2 + $0x34] sm:$0xf] %vm150, %v131
    %165 = vst.msk [vmem:[#allocation2 + $0x38] sm:$0xf] %vm150, %v132
    %166 = vst.msk [vmem:[#allocation2 + $0x3c] sm:$0xf] %vm150, %v133
    %v167 = vld [vmem:[%s0 + $0x1] sm:$0x1]
    %v168 = vlaneseq
    %v169 = vshrl.u32 %v168, 7
    %v170 = vsub.s32 0, %v169
    %v171 = vrot.slane %v167, %v170
    %vm172 = vcmp.eq.s32.totalorder %v17, %v171
    %vm173 = vcmp.eq.s32.totalorder %v18, %v171
    %vm174 = vcmp.eq.s32.totalorder %v19, %v171
    %vm175 = vcmp.eq.s32.totalorder %v20, %v171
    %vm176 = vcmp.eq.s32.totalorder %v21, %v171
    %vm177 = vcmp.eq.s32.totalorder %v22, %v171
    %vm178 = vcmp.eq.s32.totalorder %v23, %v171
    %vm179 = vcmp.eq.s32.totalorder %v24, %v171
    %vm180 = vcmp.eq.s32.totalorder %v25, %v171
    %vm181 = vcmp.eq.s32.totalorder %v26, %v171
    %vm182 = vcmp.eq.s32.totalorder %v27, %v171
    %vm183 = vcmp.eq.s32.totalorder %v28, %v171
    %vm184 = vcmp.eq.s32.totalorder %v29, %v171
    %vm185 = vcmp.eq.s32.totalorder %v30, %v171
    %vm186 = vcmp.eq.s32.totalorder %v31, %v171
    %vm187 = vcmp.eq.s32.totalorder %v32, %v171
    %v188 = vsel %vm172, 1, 0
    %v189 = vsel %vm173, 1, 0
    %v190 = vsel %vm174, 1, 0
    %v191 = vsel %vm175, 1, 0
    %v192 = vsel %vm176, 1, 0
    %v193 = vsel %vm177, 1, 0
    %v194 = vsel %vm178, 1, 0
    %v195 = vsel %vm179, 1, 0
    %v196 = vsel %vm180, 1, 0
    %v197 = vsel %vm181, 1, 0
    %v198 = vsel %vm182, 1, 0
    %v199 = vsel %vm183, 1, 0
    %v200 = vsel %vm184, 1, 0
    %v201 = vsel %vm185, 1, 0
    %v202 = vsel %vm186, 1, 0
    %v203 = vsel %vm187, 1, 0
    %v204 = vcvt.s32.f32 %v188
    %v205 = vcvt.s32.f32 %v189
    %v206 = vcvt.s32.f32 %v190
    %v207 = vcvt.s32.f32 %v191
    %v208 = vcvt.s32.f32 %v192
    %v209 = vcvt.s32.f32 %v193
    %v210 = vcvt.s32.f32 %v194
    %v211 = vcvt.s32.f32 %v195
    %v212 = vcvt.s32.f32 %v196
    %v213 = vcvt.s32.f32 %v197
    %v214 = vcvt.s32.f32 %v198
    %v215 = vcvt.s32.f32 %v199
    %v216 = vcvt.s32.f32 %v200
    %v217 = vcvt.s32.f32 %v201
    %v218 = vcvt.s32.f32 %v202
    %v219 = vcvt.s32.f32 %v203
    %v220 = vpack.c.bf16 %v205, %v204
    %v221 = vpack.c.bf16 %v207, %v206
    %v222 = vpack.c.bf16 %v209, %v208
    %v223 = vpack.c.bf16 %v211, %v210
    %v224 = vpack.c.bf16 %v213, %v212
    %v225 = vpack.c.bf16 %v215, %v214
    %v226 = vpack.c.bf16 %v217, %v216
    %v227 = vpack.c.bf16 %v219, %v218
    %v236 = vunpack.c.l.b16 %v220
    %v237 = vunpack.c.h.b16 %v220
    %v238 = vunpack.c.l.b16 %v221
    %v239 = vunpack.c.h.b16 %v221
    %v240 = vunpack.c.l.b16 %v222
    %v241 = vunpack.c.h.b16 %v222
    %v242 = vunpack.c.l.b16 %v223
    %v243 = vunpack.c.h.b16 %v223
    %v244 = vunpack.c.l.b16 %v224
    %v245 = vunpack.c.h.b16 %v224
    %v246 = vunpack.c.l.b16 %v225
    %v247 = vunpack.c.h.b16 %v225
    %v248 = vunpack.c.l.b16 %v226
    %v249 = vunpack.c.h.b16 %v226
    %v250 = vunpack.c.l.b16 %v227
    %v251 = vunpack.c.h.b16 %v227
    %v252 = vpack.c.b16 %v236, %v236
    %v253 = vpack.c.b16 %v237, %v237
    %v254 = vpack.c.b16 %v238, %v238
    %v255 = vpack.c.b16 %v239, %v239
    %v256 = vpack.c.b16 %v240, %v240
    %v257 = vpack.c.b16 %v241, %v241
    %v258 = vpack.c.b16 %v242, %v242
    %v259 = vpack.c.b16 %v243, %v243
    %v260 = vpack.c.b16 %v244, %v244
    %v261 = vpack.c.b16 %v245, %v245
    %v262 = vpack.c.b16 %v246, %v246
    %v263 = vpack.c.b16 %v247, %v247
    %v264 = vpack.c.b16 %v248, %v248
    %v265 = vpack.c.b16 %v249, %v249
    %v266 = vpack.c.b16 %v250, %v250
    %v267 = vpack.c.b16 %v251, %v251
    %284 = vst.msk [vmem:[#allocation2 + $0x40] sm:$0xf] %vm150, %v252
    %285 = vst.msk [vmem:[#allocation2 + $0x44] sm:$0xf] %vm150, %v253
    %286 = vst.msk [vmem:[#allocation2 + $0x48] sm:$0xf] %vm150, %v254
    %287 = vst.msk [vmem:[#allocation2 + $0x4c] sm:$0xf] %vm150, %v255
    %288 = vst.msk [vmem:[#allocation2 + $0x50] sm:$0xf] %vm150, %v256
    %289 = vst.msk [vmem:[#allocation2 + $0x54] sm:$0xf] %vm150, %v257
    %290 = vst.msk [vmem:[#allocation2 + $0x58] sm:$0xf] %vm150, %v258
    %291 = vst.msk [vmem:[#allocation2 + $0x5c] sm:$0xf] %vm150, %v259
    %292 = vst.msk [vmem:[#allocation2 + $0x60] sm:$0xf] %vm150, %v260
    %293 = vst.msk [vmem:[#allocation2 + $0x64] sm:$0xf] %vm150, %v261
    %294 = vst.msk [vmem:[#allocation2 + $0x68] sm:$0xf] %vm150, %v262
    %295 = vst.msk [vmem:[#allocation2 + $0x6c] sm:$0xf] %vm150, %v263
    %296 = vst.msk [vmem:[#allocation2 + $0x70] sm:$0xf] %vm150, %v264
    %297 = vst.msk [vmem:[#allocation2 + $0x74] sm:$0xf] %vm150, %v265
    %298 = vst.msk [vmem:[#allocation2 + $0x78] sm:$0xf] %vm150, %v266
    %299 = vst.msk [vmem:[#allocation2 + $0x7c] sm:$0xf] %vm150, %v267
    %v300 = vld [vmem:[%s0 + $0x2] sm:$0x1]
    %v301 = vlaneseq
    %v302 = vshrl.u32 %v301, 7
    %v303 = vsub.s32 0, %v302
    %v304 = vrot.slane %v300, %v303
    %vm305 = vcmp.eq.s32.totalorder %v17, %v304
    %vm306 = vcmp.eq.s32.totalorder %v18, %v304
    %vm307 = vcmp.eq.s32.totalorder %v19, %v304
    %vm308 = vcmp.eq.s32.totalorder %v20, %v304
    %vm309 = vcmp.eq.s32.totalorder %v21, %v304
    %vm310 = vcmp.eq.s32.totalorder %v22, %v304
    %vm311 = vcmp.eq.s32.totalorder %v23, %v304
    %vm312 = vcmp.eq.s32.totalorder %v24, %v304
    %vm313 = vcmp.eq.s32.totalorder %v25, %v304
    %vm314 = vcmp.eq.s32.totalorder %v26, %v304
    %vm315 = vcmp.eq.s32.totalorder %v27, %v304
    %vm316 = vcmp.eq.s32.totalorder %v28, %v304
    %vm317 = vcmp.eq.s32.totalorder %v29, %v304
    %vm318 = vcmp.eq.s32.totalorder %v30, %v304
    %vm319 = vcmp.eq.s32.totalorder %v31, %v304
    %vm320 = vcmp.eq.s32.totalorder %v32, %v304
    %v321 = vsel %vm305, 1, 0
    %v322 = vsel %vm306, 1, 0
    %v323 = vsel %vm307, 1, 0
    %v324 = vsel %vm308, 1, 0
    %v325 = vsel %vm309, 1, 0
    %v326 = vsel %vm310, 1, 0
    %v327 = vsel %vm311, 1, 0
    %v328 = vsel %vm312, 1, 0
    %v329 = vsel %vm313, 1, 0
    %v330 = vsel %vm314, 1, 0
    %v331 = vsel %vm315, 1, 0
    %v332 = vsel %vm316, 1, 0
    %v333 = vsel %vm317, 1, 0
    %v334 = vsel %vm318, 1, 0
    %v335 = vsel %vm319, 1, 0
    %v336 = vsel %vm320, 1, 0
    %v337 = vcvt.s32.f32 %v321
    %v338 = vcvt.s32.f32 %v322
    %v339 = vcvt.s32.f32 %v323
    %v340 = vcvt.s32.f32 %v324
    %v341 = vcvt.s32.f32 %v325
    %v342 = vcvt.s32.f32 %v326
    %v343 = vcvt.s32.f32 %v327
    %v344 = vcvt.s32.f32 %v328
    %v345 = vcvt.s32.f32 %v329
    %v346 = vcvt.s32.f32 %v330
    %v347 = vcvt.s32.f32 %v331
    %v348 = vcvt.s32.f32 %v332
    %v349 = vcvt.s32.f32 %v333
    %v350 = vcvt.s32.f32 %v334
    %v351 = vcvt.s32.f32 %v335
    %v352 = vcvt.s32.f32 %v336
    %v353 = vpack.c.bf16 %v338, %v337
    %v354 = vpack.c.bf16 %v340, %v339
    %v355 = vpack.c.bf16 %v342, %v341
    %v356 = vpack.c.bf16 %v344, %v343
    %v357 = vpack.c.bf16 %v346, %v345
    %v358 = vpack.c.bf16 %v348, %v347
    %v359 = vpack.c.bf16 %v350, %v349
    %v360 = vpack.c.bf16 %v352, %v351
    %v369 = vunpack.c.l.b16 %v353
    %v370 = vunpack.c.h.b16 %v353
    %v371 = vunpack.c.l.b16 %v354
    %v372 = vunpack.c.h.b16 %v354
    %v373 = vunpack.c.l.b16 %v355
    %v374 = vunpack.c.h.b16 %v355
    %v375 = vunpack.c.l.b16 %v356
    %v376 = vunpack.c.h.b16 %v356
    %v377 = vunpack.c.l.b16 %v357
    %v378 = vunpack.c.h.b16 %v357
    %v379 = vunpack.c.l.b16 %v358
    %v380 = vunpack.c.h.b16 %v358
    %v381 = vunpack.c.l.b16 %v359
    %v382 = vunpack.c.h.b16 %v359
    %v383 = vunpack.c.l.b16 %v360
    %v384 = vunpack.c.h.b16 %v360
    %v385 = vpack.c.b16 %v369, %v369
    %v386 = vpack.c.b16 %v370, %v370
    %v387 = vpack.c.b16 %v371, %v371
    %v388 = vpack.c.b16 %v372, %v372
    %v389 = vpack.c.b16 %v373, %v373
    %v390 = vpack.c.b16 %v374, %v374
    %v391 = vpack.c.b16 %v375, %v375
    %v392 = vpack.c.b16 %v376, %v376
    %v393 = vpack.c.b16 %v377, %v377
    %v394 = vpack.c.b16 %v378, %v378
    %v395 = vpack.c.b16 %v379, %v379
    %v396 = vpack.c.b16 %v380, %v380
    %v397 = vpack.c.b16 %v381, %v381
    %v398 = vpack.c.b16 %v382, %v382
    %v399 = vpack.c.b16 %v383, %v383
    %v400 = vpack.c.b16 %v384, %v384
    %417 = vst.msk [vmem:[#allocation2 + $0x80] sm:$0xf] %vm150, %v385
    %418 = vst.msk [vmem:[#allocation2 + $0x84] sm:$0xf] %vm150, %v386
    %419 = vst.msk [vmem:[#allocation2 + $0x88] sm:$0xf] %vm150, %v387
    %420 = vst.msk [vmem:[#allocation2 + $0x8c] sm:$0xf] %vm150, %v388
    %421 = vst.msk [vmem:[#allocation2 + $0x90] sm:$0xf] %vm150, %v389
    %422 = vst.msk [vmem:[#allocation2 + $0x94] sm:$0xf] %vm150, %v390
    %423 = vst.msk [vmem:[#allocation2 + $0x98] sm:$0xf] %vm150, %v391
    %424 = vst.msk [vmem:[#allocation2 + $0x9c] sm:$0xf] %vm150, %v392
    %425 = vst.msk [vmem:[#allocation2 + $0xa0] sm:$0xf] %vm150, %v393
    %426 = vst.msk [vmem:[#allocation2 + $0xa4] sm:$0xf] %vm150, %v394
    %427 = vst.msk [vmem:[#allocation2 + $0xa8] sm:$0xf] %vm150, %v395
    %428 = vst.msk [vmem:[#allocation2 + $0xac] sm:$0xf] %vm150, %v396
    %429 = vst.msk [vmem:[#allocation2 + $0xb0] sm:$0xf] %vm150, %v397
    %430 = vst.msk [vmem:[#allocation2 + $0xb4] sm:$0xf] %vm150, %v398
    %431 = vst.msk [vmem:[#allocation2 + $0xb8] sm:$0xf] %vm150, %v399
    %432 = vst.msk [vmem:[#allocation2 + $0xbc] sm:$0xf] %vm150, %v400
    %v433 = vld [vmem:[%s0 + $0x3] sm:$0x1]
    %v434 = vlaneseq
    %v435 = vshrl.u32 %v434, 7
    %v436 = vsub.s32 0, %v435
    %v437 = vrot.slane %v433, %v436
    %vm438 = vcmp.eq.s32.totalorder %v17, %v437
    %vm439 = vcmp.eq.s32.totalorder %v18, %v437
    %vm440 = vcmp.eq.s32.totalorder %v19, %v437
    %vm441 = vcmp.eq.s32.totalorder %v20, %v437
    %vm442 = vcmp.eq.s32.totalorder %v21, %v437
    %vm443 = vcmp.eq.s32.totalorder %v22, %v437
    %vm444 = vcmp.eq.s32.totalorder %v23, %v437
    %vm445 = vcmp.eq.s32.totalorder %v24, %v437
    %vm446 = vcmp.eq.s32.totalorder %v25, %v437
    %vm447 = vcmp.eq.s32.totalorder %v26, %v437
    %vm448 = vcmp.eq.s32.totalorder %v27, %v437
    %vm449 = vcmp.eq.s32.totalorder %v28, %v437
    %vm450 = vcmp.eq.s32.totalorder %v29, %v437
    %vm451 = vcmp.eq.s32.totalorder %v30, %v437
    %vm452 = vcmp.eq.s32.totalorder %v31, %v437
    %vm453 = vcmp.eq.s32.totalorder %v32, %v437
    %v454 = vsel %vm438, 1, 0
    %v455 = vsel %vm439, 1, 0
    %v456 = vsel %vm440, 1, 0
    %v457 = vsel %vm441, 1, 0
    %v458 = vsel %vm442, 1, 0
    %v459 = vsel %vm443, 1, 0
    %v460 = vsel %vm444, 1, 0
    %v461 = vsel %vm445, 1, 0
    %v462 = vsel %vm446, 1, 0
    %v463 = vsel %vm447, 1, 0
    %v464 = vsel %vm448, 1, 0
    %v465 = vsel %vm449, 1, 0
    %v466 = vsel %vm450, 1, 0
    %v467 = vsel %vm451, 1, 0
    %v468 = vsel %vm452, 1, 0
    %v469 = vsel %vm453, 1, 0
    %v470 = vcvt.s32.f32 %v454
    %v471 = vcvt.s32.f32 %v455
    %v472 = vcvt.s32.f32 %v456
    %v473 = vcvt.s32.f32 %v457
    %v474 = vcvt.s32.f32 %v458
    %v475 = vcvt.s32.f32 %v459
    %v476 = vcvt.s32.f32 %v460
    %v477 = vcvt.s32.f32 %v461
    %v478 = vcvt.s32.f32 %v462
    %v479 = vcvt.s32.f32 %v463
    %v480 = vcvt.s32.f32 %v464
    %v481 = vcvt.s32.f32 %v465
    %v482 = vcvt.s32.f32 %v466
    %v483 = vcvt.s32.f32 %v467
    %v484 = vcvt.s32.f32 %v468
    %v485 = vcvt.s32.f32 %v469
    %v486 = vpack.c.bf16 %v471, %v470
    %v487 = vpack.c.bf16 %v473, %v472
    %v488 = vpack.c.bf16 %v475, %v474
    %v489 = vpack.c.bf16 %v477, %v476
    %v490 = vpack.c.bf16 %v479, %v478
    %v491 = vpack.c.bf16 %v481, %v480
    %v492 = vpack.c.bf16 %v483, %v482
    %v493 = vpack.c.bf16 %v485, %v484
    %v502 = vunpack.c.l.b16 %v486
    %v503 = vunpack.c.h.b16 %v486
    %v504 = vunpack.c.l.b16 %v487
    %v505 = vunpack.c.h.b16 %v487
    %v506 = vunpack.c.l.b16 %v488
    %v507 = vunpack.c.h.b16 %v488
    %v508 = vunpack.c.l.b16 %v489
    %v509 = vunpack.c.h.b16 %v489
    %v510 = vunpack.c.l.b16 %v490
    %v511 = vunpack.c.h.b16 %v490
    %v512 = vunpack.c.l.b16 %v491
    %v513 = vunpack.c.h.b16 %v491
    %v514 = vunpack.c.l.b16 %v492
    %v515 = vunpack.c.h.b16 %v492
    %v516 = vunpack.c.l.b16 %v493
    %v517 = vunpack.c.h.b16 %v493
    %v518 = vpack.c.b16 %v502, %v502
    %v519 = vpack.c.b16 %v503, %v503
    %v520 = vpack.c.b16 %v504, %v504
    %v521 = vpack.c.b16 %v505, %v505
    %v522 = vpack.c.b16 %v506, %v506
    %v523 = vpack.c.b16 %v507, %v507
    %v524 = vpack.c.b16 %v508, %v508
    %v525 = vpack.c.b16 %v509, %v509
    %v526 = vpack.c.b16 %v510, %v510
    %v527 = vpack.c.b16 %v511, %v511
    %v528 = vpack.c.b16 %v512, %v512
    %v529 = vpack.c.b16 %v513, %v513
    %v530 = vpack.c.b16 %v514, %v514
    %v531 = vpack.c.b16 %v515, %v515
    %v532 = vpack.c.b16 %v516, %v516
    %v533 = vpack.c.b16 %v517, %v517
    %550 = vst.msk [vmem:[#allocation2 + $0xc0] sm:$0xf] %vm150, %v518
    %551 = vst.msk [vmem:[#allocation2 + $0xc4] sm:$0xf] %vm150, %v519
    %552 = vst.msk [vmem:[#allocation2 + $0xc8] sm:$0xf] %vm150, %v520
    %553 = vst.msk [vmem:[#allocation2 + $0xcc] sm:$0xf] %vm150, %v521
    %554 = vst.msk [vmem:[#allocation2 + $0xd0] sm:$0xf] %vm150, %v522
    %555 = vst.msk [vmem:[#allocation2 + $0xd4] sm:$0xf] %vm150, %v523
    %556 = vst.msk [vmem:[#allocation2 + $0xd8] sm:$0xf] %vm150, %v524
    %557 = vst.msk [vmem:[#allocation2 + $0xdc] sm:$0xf] %vm150, %v525
    %558 = vst.msk [vmem:[#allocation2 + $0xe0] sm:$0xf] %vm150, %v526
    %559 = vst.msk [vmem:[#allocation2 + $0xe4] sm:$0xf] %vm150, %v527
    %560 = vst.msk [vmem:[#allocation2 + $0xe8] sm:$0xf] %vm150, %v528
    %561 = vst.msk [vmem:[#allocation2 + $0xec] sm:$0xf] %vm150, %v529
    %562 = vst.msk [vmem:[#allocation2 + $0xf0] sm:$0xf] %vm150, %v530
    %563 = vst.msk [vmem:[#allocation2 + $0xf4] sm:$0xf] %vm150, %v531
    %564 = vst.msk [vmem:[#allocation2 + $0xf8] sm:$0xf] %vm150, %v532
    %565 = vst.msk [vmem:[#allocation2 + $0xfc] sm:$0xf] %vm150, %v533
    %v566 = vld [vmem:[%s0 + $0x4] sm:$0x1]
    %v567 = vlaneseq
    %v568 = vshrl.u32 %v567, 7
    %v569 = vsub.s32 0, %v568
    %v570 = vrot.slane %v566, %v569
    %vm571 = vcmp.eq.s32.totalorder %v17, %v570
    %vm572 = vcmp.eq.s32.totalorder %v18, %v570
    %vm573 = vcmp.eq.s32.totalorder %v19, %v570
    %vm574 = vcmp.eq.s32.totalorder %v20, %v570
    %vm575 = vcmp.eq.s32.totalorder %v21, %v570
    %vm576 = vcmp.eq.s32.totalorder %v22, %v570
    %vm577 = vcmp.eq.s32.totalorder %v23, %v570
    %vm578 = vcmp.eq.s32.totalorder %v24, %v570
    %vm579 = vcmp.eq.s32.totalorder %v25, %v570
    %vm580 = vcmp.eq.s32.totalorder %v26, %v570
    %vm581 = vcmp.eq.s32.totalorder %v27, %v570
    %vm582 = vcmp.eq.s32.totalorder %v28, %v570
    %vm583 = vcmp.eq.s32.totalorder %v29, %v570
    %vm584 = vcmp.eq.s32.totalorder %v30, %v570
    %vm585 = vcmp.eq.s32.totalorder %v31, %v570
    %vm586 = vcmp.eq.s32.totalorder %v32, %v570
    %v587 = vsel %vm571, 1, 0
    %v588 = vsel %vm572, 1, 0
    %v589 = vsel %vm573, 1, 0
    %v590 = vsel %vm574, 1, 0
    %v591 = vsel %vm575, 1, 0
    %v592 = vsel %vm576, 1, 0
    %v593 = vsel %vm577, 1, 0
    %v594 = vsel %vm578, 1, 0
    %v595 = vsel %vm579, 1, 0
    %v596 = vsel %vm580, 1, 0
    %v597 = vsel %vm581, 1, 0
    %v598 = vsel %vm582, 1, 0
    %v599 = vsel %vm583, 1, 0
    %v600 = vsel %vm584, 1, 0
    %v601 = vsel %vm585, 1, 0
    %v602 = vsel %vm586, 1, 0
    %v603 = vcvt.s32.f32 %v587
    %v604 = vcvt.s32.f32 %v588
    %v605 = vcvt.s32.f32 %v589
    %v606 = vcvt.s32.f32 %v590
    %v607 = vcvt.s32.f32 %v591
    %v608 = vcvt.s32.f32 %v592
    %v609 = vcvt.s32.f32 %v593
    %v610 = vcvt.s32.f32 %v594
    %v611 = vcvt.s32.f32 %v595
    %v612 = vcvt.s32.f32 %v596
    %v613 = vcvt.s32.f32 %v597
    %v614 = vcvt.s32.f32 %v598
    %v615 = vcvt.s32.f32 %v599
    %v616 = vcvt.s32.f32 %v600
    %v617 = vcvt.s32.f32 %v601
    %v618 = vcvt.s32.f32 %v602
    %v619 = vpack.c.bf16 %v604, %v603
    %v620 = vpack.c.bf16 %v606, %v605
    %v621 = vpack.c.bf16 %v608, %v607
    %v622 = vpack.c.bf16 %v610, %v609
    %v623 = vpack.c.bf16 %v612, %v611
    %v624 = vpack.c.bf16 %v614, %v613
    %v625 = vpack.c.bf16 %v616, %v615
    %v626 = vpack.c.bf16 %v618, %v617
    %v635 = vunpack.c.l.b16 %v619
    %v636 = vunpack.c.h.b16 %v619
    %v637 = vunpack.c.l.b16 %v620
    %v638 = vunpack.c.h.b16 %v620
    %v639 = vunpack.c.l.b16 %v621
    %v640 = vunpack.c.h.b16 %v621
    %v641 = vunpack.c.l.b16 %v622
    %v642 = vunpack.c.h.b16 %v622
    %v643 = vunpack.c.l.b16 %v623
    %v644 = vunpack.c.h.b16 %v623
    %v645 = vunpack.c.l.b16 %v624
    %v646 = vunpack.c.h.b16 %v624
    %v647 = vunpack.c.l.b16 %v625
    %v648 = vunpack.c.h.b16 %v625
    %v649 = vunpack.c.l.b16 %v626
    %v650 = vunpack.c.h.b16 %v626
    %v651 = vpack.c.b16 %v635, %v635
    %v652 = vpack.c.b16 %v636, %v636
    %v653 = vpack.c.b16 %v637, %v637
    %v654 = vpack.c.b16 %v638, %v638
    %v655 = vpack.c.b16 %v639, %v639
    %v656 = vpack.c.b16 %v640, %v640
    %v657 = vpack.c.b16 %v641, %v641
    %v658 = vpack.c.b16 %v642, %v642
    %v659 = vpack.c.b16 %v643, %v643
    %v660 = vpack.c.b16 %v644, %v644
    %v661 = vpack.c.b16 %v645, %v645
    %v662 = vpack.c.b16 %v646, %v646
    %v663 = vpack.c.b16 %v647, %v647
    %v664 = vpack.c.b16 %v648, %v648
    %v665 = vpack.c.b16 %v649, %v649
    %v666 = vpack.c.b16 %v650, %v650
    %683 = vst.msk [vmem:[#allocation2 + $0x100] sm:$0xf] %vm150, %v651
    %684 = vst.msk [vmem:[#allocation2 + $0x104] sm:$0xf] %vm150, %v652
    %685 = vst.msk [vmem:[#allocation2 + $0x108] sm:$0xf] %vm150, %v653
    %686 = vst.msk [vmem:[#allocation2 + $0x10c] sm:$0xf] %vm150, %v654
    %687 = vst.msk [vmem:[#allocation2 + $0x110] sm:$0xf] %vm150, %v655
    %688 = vst.msk [vmem:[#allocation2 + $0x114] sm:$0xf] %vm150, %v656
    %689 = vst.msk [vmem:[#allocation2 + $0x118] sm:$0xf] %vm150, %v657
    %690 = vst.msk [vmem:[#allocation2 + $0x11c] sm:$0xf] %vm150, %v658
    %691 = vst.msk [vmem:[#allocation2 + $0x120] sm:$0xf] %vm150, %v659
    %692 = vst.msk [vmem:[#allocation2 + $0x124] sm:$0xf] %vm150, %v660
    %693 = vst.msk [vmem:[#allocation2 + $0x128] sm:$0xf] %vm150, %v661
    %694 = vst.msk [vmem:[#allocation2 + $0x12c] sm:$0xf] %vm150, %v662
    %695 = vst.msk [vmem:[#allocation2 + $0x130] sm:$0xf] %vm150, %v663
    %696 = vst.msk [vmem:[#allocation2 + $0x134] sm:$0xf] %vm150, %v664
    %697 = vst.msk [vmem:[#allocation2 + $0x138] sm:$0xf] %vm150, %v665
    %698 = vst.msk [vmem:[#allocation2 + $0x13c] sm:$0xf] %vm150, %v666
    %v699 = vld [vmem:[%s0 + $0x5] sm:$0x1]
    %v700 = vlaneseq
    %v701 = vshrl.u32 %v700, 7
    %v702 = vsub.s32 0, %v701
    %v703 = vrot.slane %v699, %v702
    %vm704 = vcmp.eq.s32.totalorder %v17, %v703
    %vm705 = vcmp.eq.s32.totalorder %v18, %v703
    %vm706 = vcmp.eq.s32.totalorder %v19, %v703
    %vm707 = vcmp.eq.s32.totalorder %v20, %v703
    %vm708 = vcmp.eq.s32.totalorder %v21, %v703
    %vm709 = vcmp.eq.s32.totalorder %v22, %v703
    %vm710 = vcmp.eq.s32.totalorder %v23, %v703
    %vm711 = vcmp.eq.s32.totalorder %v24, %v703
    %vm712 = vcmp.eq.s32.totalorder %v25, %v703
    %vm713 = vcmp.eq.s32.totalorder %v26, %v703
    %vm714 = vcmp.eq.s32.totalorder %v27, %v703
    %vm715 = vcmp.eq.s32.totalorder %v28, %v703
    %vm716 = vcmp.eq.s32.totalorder %v29, %v703
    %vm717 = vcmp.eq.s32.totalorder %v30, %v703
    %vm718 = vcmp.eq.s32.totalorder %v31, %v703
    %vm719 = vcmp.eq.s32.totalorder %v32, %v703
    %v720 = vsel %vm704, 1, 0
    %v721 = vsel %vm705, 1, 0
    %v722 = vsel %vm706, 1, 0
    %v723 = vsel %vm707, 1, 0
    %v724 = vsel %vm708, 1, 0
    %v725 = vsel %vm709, 1, 0
    %v726 = vsel %vm710, 1, 0
    %v727 = vsel %vm711, 1, 0
    %v728 = vsel %vm712, 1, 0
    %v729 = vsel %vm713, 1, 0
    %v730 = vsel %vm714, 1, 0
    %v731 = vsel %vm715, 1, 0
    %v732 = vsel %vm716, 1, 0
    %v733 = vsel %vm717, 1, 0
    %v734 = vsel %vm718, 1, 0
    %v735 = vsel %vm719, 1, 0
    %v736 = vcvt.s32.f32 %v720
    %v737 = vcvt.s32.f32 %v721
    %v738 = vcvt.s32.f32 %v722
    %v739 = vcvt.s32.f32 %v723
    %v740 = vcvt.s32.f32 %v724
    %v741 = vcvt.s32.f32 %v725
    %v742 = vcvt.s32.f32 %v726
    %v743 = vcvt.s32.f32 %v727
    %v744 = vcvt.s32.f32 %v728
    %v745 = vcvt.s32.f32 %v729
    %v746 = vcvt.s32.f32 %v730
    %v747 = vcvt.s32.f32 %v731
    %v748 = vcvt.s32.f32 %v732
    %v749 = vcvt.s32.f32 %v733
    %v750 = vcvt.s32.f32 %v734
    %v751 = vcvt.s32.f32 %v735
    %v752 = vpack.c.bf16 %v737, %v736
    %v753 = vpack.c.bf16 %v739, %v738
    %v754 = vpack.c.bf16 %v741, %v740
    %v755 = vpack.c.bf16 %v743, %v742
    %v756 = vpack.c.bf16 %v745, %v744
    %v757 = vpack.c.bf16 %v747, %v746
    %v758 = vpack.c.bf16 %v749, %v748
    %v759 = vpack.c.bf16 %v751, %v750
    %v768 = vunpack.c.l.b16 %v752
    %v769 = vunpack.c.h.b16 %v752
    %v770 = vunpack.c.l.b16 %v753
    %v771 = vunpack.c.h.b16 %v753
    %v772 = vunpack.c.l.b16 %v754
    %v773 = vunpack.c.h.b16 %v754
    %v774 = vunpack.c.l.b16 %v755
    %v775 = vunpack.c.h.b16 %v755
    %v776 = vunpack.c.l.b16 %v756
    %v777 = vunpack.c.h.b16 %v756
    %v778 = vunpack.c.l.b16 %v757
    %v779 = vunpack.c.h.b16 %v757
    %v780 = vunpack.c.l.b16 %v758
    %v781 = vunpack.c.h.b16 %v758
    %v782 = vunpack.c.l.b16 %v759
    %v783 = vunpack.c.h.b16 %v759
    %v784 = vpack.c.b16 %v768, %v768
    %v785 = vpack.c.b16 %v769, %v769
    %v786 = vpack.c.b16 %v770, %v770
    %v787 = vpack.c.b16 %v771, %v771
    %v788 = vpack.c.b16 %v772, %v772
    %v789 = vpack.c.b16 %v773, %v773
    %v790 = vpack.c.b16 %v774, %v774
    %v791 = vpack.c.b16 %v775, %v775
    %v792 = vpack.c.b16 %v776, %v776
    %v793 = vpack.c.b16 %v777, %v777
    %v794 = vpack.c.b16 %v778, %v778
    %v795 = vpack.c.b16 %v779, %v779
    %v796 = vpack.c.b16 %v780, %v780
    %v797 = vpack.c.b16 %v781, %v781
    %v798 = vpack.c.b16 %v782, %v782
    %v799 = vpack.c.b16 %v783, %v783
    %816 = vst.msk [vmem:[#allocation2 + $0x140] sm:$0xf] %vm150, %v784
    %817 = vst.msk [vmem:[#allocation2 + $0x144] sm:$0xf] %vm150, %v785
    %818 = vst.msk [vmem:[#allocation2 + $0x148] sm:$0xf] %vm150, %v786
    %819 = vst.msk [vmem:[#allocation2 + $0x14c] sm:$0xf] %vm150, %v787
    %820 = vst.msk [vmem:[#allocation2 + $0x150] sm:$0xf] %vm150, %v788
    %821 = vst.msk [vmem:[#allocation2 + $0x154] sm:$0xf] %vm150, %v789
    %822 = vst.msk [vmem:[#allocation2 + $0x158] sm:$0xf] %vm150, %v790
    %823 = vst.msk [vmem:[#allocation2 + $0x15c] sm:$0xf] %vm150, %v791
    %824 = vst.msk [vmem:[#allocation2 + $0x160] sm:$0xf] %vm150, %v792
    %825 = vst.msk [vmem:[#allocation2 + $0x164] sm:$0xf] %vm150, %v793
    %826 = vst.msk [vmem:[#allocation2 + $0x168] sm:$0xf] %vm150, %v794
    %827 = vst.msk [vmem:[#allocation2 + $0x16c] sm:$0xf] %vm150, %v795
    %828 = vst.msk [vmem:[#allocation2 + $0x170] sm:$0xf] %vm150, %v796
    %829 = vst.msk [vmem:[#allocation2 + $0x174] sm:$0xf] %vm150, %v797
    %830 = vst.msk [vmem:[#allocation2 + $0x178] sm:$0xf] %vm150, %v798
    %831 = vst.msk [vmem:[#allocation2 + $0x17c] sm:$0xf] %vm150, %v799
    %v832 = vld [vmem:[%s0 + $0x6] sm:$0x1]
    %v833 = vlaneseq
    %v834 = vshrl.u32 %v833, 7
    %v835 = vsub.s32 0, %v834
    %v836 = vrot.slane %v832, %v835
    %vm837 = vcmp.eq.s32.totalorder %v17, %v836
    %vm838 = vcmp.eq.s32.totalorder %v18, %v836
    %vm839 = vcmp.eq.s32.totalorder %v19, %v836
    %vm840 = vcmp.eq.s32.totalorder %v20, %v836
    %vm841 = vcmp.eq.s32.totalorder %v21, %v836
    %vm842 = vcmp.eq.s32.totalorder %v22, %v836
    %vm843 = vcmp.eq.s32.totalorder %v23, %v836
    %vm844 = vcmp.eq.s32.totalorder %v24, %v836
    %vm845 = vcmp.eq.s32.totalorder %v25, %v836
    %vm846 = vcmp.eq.s32.totalorder %v26, %v836
    %vm847 = vcmp.eq.s32.totalorder %v27, %v836
    %vm848 = vcmp.eq.s32.totalorder %v28, %v836
    %vm849 = vcmp.eq.s32.totalorder %v29, %v836
    %vm850 = vcmp.eq.s32.totalorder %v30, %v836
    %vm851 = vcmp.eq.s32.totalorder %v31, %v836
    %vm852 = vcmp.eq.s32.totalorder %v32, %v836
    %v853 = vsel %vm837, 1, 0
    %v854 = vsel %vm838, 1, 0
    %v855 = vsel %vm839, 1, 0
    %v856 = vsel %vm840, 1, 0
    %v857 = vsel %vm841, 1, 0
    %v858 = vsel %vm842, 1, 0
    %v859 = vsel %vm843, 1, 0
    %v860 = vsel %vm844, 1, 0
    %v861 = vsel %vm845, 1, 0
    %v862 = vsel %vm846, 1, 0
    %v863 = vsel %vm847, 1, 0
    %v864 = vsel %vm848, 1, 0
    %v865 = vsel %vm849, 1, 0
    %v866 = vsel %vm850, 1, 0
    %v867 = vsel %vm851, 1, 0
    %v868 = vsel %vm852, 1, 0
    %v869 = vcvt.s32.f32 %v853
    %v870 = vcvt.s32.f32 %v854
    %v871 = vcvt.s32.f32 %v855
    %v872 = vcvt.s32.f32 %v856
    %v873 = vcvt.s32.f32 %v857
    %v874 = vcvt.s32.f32 %v858
    %v875 = vcvt.s32.f32 %v859
    %v876 = vcvt.s32.f32 %v860
    %v877 = vcvt.s32.f32 %v861
    %v878 = vcvt.s32.f32 %v862
    %v879 = vcvt.s32.f32 %v863
    %v880 = vcvt.s32.f32 %v864
    %v881 = vcvt.s32.f32 %v865
    %v882 = vcvt.s32.f32 %v866
    %v883 = vcvt.s32.f32 %v867
    %v884 = vcvt.s32.f32 %v868
    %v885 = vpack.c.bf16 %v870, %v869
    %v886 = vpack.c.bf16 %v872, %v871
    %v887 = vpack.c.bf16 %v874, %v873
    %v888 = vpack.c.bf16 %v876, %v875
    %v889 = vpack.c.bf16 %v878, %v877
    %v890 = vpack.c.bf16 %v880, %v879
    %v891 = vpack.c.bf16 %v882, %v881
    %v892 = vpack.c.bf16 %v884, %v883
    %v901 = vunpack.c.l.b16 %v885
    %v902 = vunpack.c.h.b16 %v885
    %v903 = vunpack.c.l.b16 %v886
    %v904 = vunpack.c.h.b16 %v886
    %v905 = vunpack.c.l.b16 %v887
    %v906 = vunpack.c.h.b16 %v887
    %v907 = vunpack.c.l.b16 %v888
    %v908 = vunpack.c.h.b16 %v888
    %v909 = vunpack.c.l.b16 %v889
    %v910 = vunpack.c.h.b16 %v889
    %v911 = vunpack.c.l.b16 %v890
    %v912 = vunpack.c.h.b16 %v890
    %v913 = vunpack.c.l.b16 %v891
    %v914 = vunpack.c.h.b16 %v891
    %v915 = vunpack.c.l.b16 %v892
    %v916 = vunpack.c.h.b16 %v892
    %v917 = vpack.c.b16 %v901, %v901
    %v918 = vpack.c.b16 %v902, %v902
    %v919 = vpack.c.b16 %v903, %v903
    %v920 = vpack.c.b16 %v904, %v904
    %v921 = vpack.c.b16 %v905, %v905
    %v922 = vpack.c.b16 %v906, %v906
    %v923 = vpack.c.b16 %v907, %v907
    %v924 = vpack.c.b16 %v908, %v908
    %v925 = vpack.c.b16 %v909, %v909
    %v926 = vpack.c.b16 %v910, %v910
    %v927 = vpack.c.b16 %v911, %v911
    %v928 = vpack.c.b16 %v912, %v912
    %v929 = vpack.c.b16 %v913, %v913
    %v930 = vpack.c.b16 %v914, %v914
    %v931 = vpack.c.b16 %v915, %v915
    %v932 = vpack.c.b16 %v916, %v916
    %949 = vst.msk [vmem:[#allocation2 + $0x180] sm:$0xf] %vm150, %v917
    %950 = vst.msk [vmem:[#allocation2 + $0x184] sm:$0xf] %vm150, %v918
    %951 = vst.msk [vmem:[#allocation2 + $0x188] sm:$0xf] %vm150, %v919
    %952 = vst.msk [vmem:[#allocation2 + $0x18c] sm:$0xf] %vm150, %v920
    %953 = vst.msk [vmem:[#allocation2 + $0x190] sm:$0xf] %vm150, %v921
    %954 = vst.msk [vmem:[#allocation2 + $0x194] sm:$0xf] %vm150, %v922
    %955 = vst.msk [vmem:[#allocation2 + $0x198] sm:$0xf] %vm150, %v923
    %956 = vst.msk [vmem:[#allocation2 + $0x19c] sm:$0xf] %vm150, %v924
    %957 = vst.msk [vmem:[#allocation2 + $0x1a0] sm:$0xf] %vm150, %v925
    %958 = vst.msk [vmem:[#allocation2 + $0x1a4] sm:$0xf] %vm150, %v926
    %959 = vst.msk [vmem:[#allocation2 + $0x1a8] sm:$0xf] %vm150, %v927
    %960 = vst.msk [vmem:[#allocation2 + $0x1ac] sm:$0xf] %vm150, %v928
    %961 = vst.msk [vmem:[#allocation2 + $0x1b0] sm:$0xf] %vm150, %v929
    %962 = vst.msk [vmem:[#allocation2 + $0x1b4] sm:$0xf] %vm150, %v930
    %963 = vst.msk [vmem:[#allocation2 + $0x1b8] sm:$0xf] %vm150, %v931
    %964 = vst.msk [vmem:[#allocation2 + $0x1bc] sm:$0xf] %vm150, %v932
    %v965 = vld [vmem:[%s0 + $0x7] sm:$0x1]
    %v966 = vlaneseq
    %v967 = vshrl.u32 %v966, 7
    %v968 = vsub.s32 0, %v967
    %v969 = vrot.slane %v965, %v968
    %vm970 = vcmp.eq.s32.totalorder %v17, %v969
    %vm971 = vcmp.eq.s32.totalorder %v18, %v969
    %vm972 = vcmp.eq.s32.totalorder %v19, %v969
    %vm973 = vcmp.eq.s32.totalorder %v20, %v969
    %vm974 = vcmp.eq.s32.totalorder %v21, %v969
    %vm975 = vcmp.eq.s32.totalorder %v22, %v969
    %vm976 = vcmp.eq.s32.totalorder %v23, %v969
    %vm977 = vcmp.eq.s32.totalorder %v24, %v969
    %vm978 = vcmp.eq.s32.totalorder %v25, %v969
    %vm979 = vcmp.eq.s32.totalorder %v26, %v969
    %vm980 = vcmp.eq.s32.totalorder %v27, %v969
    %vm981 = vcmp.eq.s32.totalorder %v28, %v969
    %vm982 = vcmp.eq.s32.totalorder %v29, %v969
    %vm983 = vcmp.eq.s32.totalorder %v30, %v969
    %vm984 = vcmp.eq.s32.totalorder %v31, %v969
    %vm985 = vcmp.eq.s32.totalorder %v32, %v969
    %v986 = vsel %vm970, 1, 0
    %v987 = vsel %vm971, 1, 0
    %v988 = vsel %vm972, 1, 0
    %v989 = vsel %vm973, 1, 0
    %v990 = vsel %vm974, 1, 0
    %v991 = vsel %vm975, 1, 0
    %v992 = vsel %vm976, 1, 0
    %v993 = vsel %vm977, 1, 0
    %v994 = vsel %vm978, 1, 0
    %v995 = vsel %vm979, 1, 0
    %v996 = vsel %vm980, 1, 0
    %v997 = vsel %vm981, 1, 0
    %v998 = vsel %vm982, 1, 0
    %v999 = vsel %vm983, 1, 0
    %v1000 = vsel %vm984, 1, 0
    %v1001 = vsel %vm985, 1, 0
    %v1002 = vcvt.s32.f32 %v986
    %v1003 = vcvt.s32.f32 %v987
    %v1004 = vcvt.s32.f32 %v988
    %v1005 = vcvt.s32.f32 %v989
    %v1006 = vcvt.s32.f32 %v990
    %v1007 = vcvt.s32.f32 %v991
    %v1008 = vcvt.s32.f32 %v992
    %v1009 = vcvt.s32.f32 %v993
    %v1010 = vcvt.s32.f32 %v994
    %v1011 = vcvt.s32.f32 %v995
    %v1012 = vcvt.s32.f32 %v996
    %v1013 = vcvt.s32.f32 %v997
    %v1014 = vcvt.s32.f32 %v998
    %v1015 = vcvt.s32.f32 %v999
    %v1016 = vcvt.s32.f32 %v1000
    %v1017 = vcvt.s32.f32 %v1001
    %v1018 = vpack.c.bf16 %v1003, %v1002
    %v1019 = vpack.c.bf16 %v1005, %v1004
    %v1020 = vpack.c.bf16 %v1007, %v1006
    %v1021 = vpack.c.bf16 %v1009, %v1008
    %v1022 = vpack.c.bf16 %v1011, %v1010
    %v1023 = vpack.c.bf16 %v1013, %v1012
    %v1024 = vpack.c.bf16 %v1015, %v1014
    %v1025 = vpack.c.bf16 %v1017, %v1016
    %v1034 = vunpack.c.l.b16 %v1018
    %v1035 = vunpack.c.h.b16 %v1018
    %v1036 = vunpack.c.l.b16 %v1019
    %v1037 = vunpack.c.h.b16 %v1019
    %v1038 = vunpack.c.l.b16 %v1020
    %v1039 = vunpack.c.h.b16 %v1020
    %v1040 = vunpack.c.l.b16 %v1021
    %v1041 = vunpack.c.h.b16 %v1021
    %v1042 = vunpack.c.l.b16 %v1022
    %v1043 = vunpack.c.h.b16 %v1022
    %v1044 = vunpack.c.l.b16 %v1023
    %v1045 = vunpack.c.h.b16 %v1023
    %v1046 = vunpack.c.l.b16 %v1024
    %v1047 = vunpack.c.h.b16 %v1024
    %v1048 = vunpack.c.l.b16 %v1025
    %v1049 = vunpack.c.h.b16 %v1025
    %v1050 = vpack.c.b16 %v1034, %v1034
    %v1051 = vpack.c.b16 %v1035, %v1035
    %v1052 = vpack.c.b16 %v1036, %v1036
    %v1053 = vpack.c.b16 %v1037, %v1037
    %v1054 = vpack.c.b16 %v1038, %v1038
    %v1055 = vpack.c.b16 %v1039, %v1039
    %v1056 = vpack.c.b16 %v1040, %v1040
    %v1057 = vpack.c.b16 %v1041, %v1041
    %v1058 = vpack.c.b16 %v1042, %v1042
    %v1059 = vpack.c.b16 %v1043, %v1043
    %v1060 = vpack.c.b16 %v1044, %v1044
    %v1061 = vpack.c.b16 %v1045, %v1045
    %v1062 = vpack.c.b16 %v1046, %v1046
    %v1063 = vpack.c.b16 %v1047, %v1047
    %v1064 = vpack.c.b16 %v1048, %v1048
    %v1065 = vpack.c.b16 %v1049, %v1049
    %1082 = vst.msk [vmem:[#allocation2 + $0x1c0] sm:$0xf] %vm150, %v1050
    %1083 = vst.msk [vmem:[#allocation2 + $0x1c4] sm:$0xf] %vm150, %v1051
    %1084 = vst.msk [vmem:[#allocation2 + $0x1c8] sm:$0xf] %vm150, %v1052
    %1085 = vst.msk [vmem:[#allocation2 + $0x1cc] sm:$0xf] %vm150, %v1053
    %1086 = vst.msk [vmem:[#allocation2 + $0x1d0] sm:$0xf] %vm150, %v1054
    %1087 = vst.msk [vmem:[#allocation2 + $0x1d4] sm:$0xf] %vm150, %v1055
    %1088 = vst.msk [vmem:[#allocation2 + $0x1d8] sm:$0xf] %vm150, %v1056
    %1089 = vst.msk [vmem:[#allocation2 + $0x1dc] sm:$0xf] %vm150, %v1057
    %1090 = vst.msk [vmem:[#allocation2 + $0x1e0] sm:$0xf] %vm150, %v1058
    %1091 = vst.msk [vmem:[#allocation2 + $0x1e4] sm:$0xf] %vm150, %v1059
    %1092 = vst.msk [vmem:[#allocation2 + $0x1e8] sm:$0xf] %vm150, %v1060
    %1093 = vst.msk [vmem:[#allocation2 + $0x1ec] sm:$0xf] %vm150, %v1061
    %1094 = vst.msk [vmem:[#allocation2 + $0x1f0] sm:$0xf] %vm150, %v1062
    %1095 = vst.msk [vmem:[#allocation2 + $0x1f4] sm:$0xf] %vm150, %v1063
    %1096 = vst.msk [vmem:[#allocation2 + $0x1f8] sm:$0xf] %vm150, %v1064
    %1097 = vst.msk [vmem:[#allocation2 + $0x1fc] sm:$0xf] %vm150, %v1065
    %v1098 = vld [vmem:[%s1] sm:$0xff]
    %v1099 = vld [vmem:[#allocation2] sm:$0xf]
    %v1100 = vld [vmem:[#allocation2 + $0x4] sm:$0xf]
    %v1101 = vld [vmem:[#allocation2 + $0x8] sm:$0xf]
    %v1102 = vld [vmem:[#allocation2 + $0xc] sm:$0xf]
    %v1103 = vld [vmem:[#allocation2 + $0x10] sm:$0xf]
    %v1104 = vld [vmem:[#allocation2 + $0x14] sm:$0xf]
    %v1105 = vld [vmem:[#allocation2 + $0x18] sm:$0xf]
    %v1106 = vld [vmem:[#allocation2 + $0x1c] sm:$0xf]
    %v1107 = vld [vmem:[#allocation2 + $0x20] sm:$0xf]
    %v1108 = vld [vmem:[#allocation2 + $0x24] sm:$0xf]
    %v1109 = vld [vmem:[#allocation2 + $0x28] sm:$0xf]
    %v1110 = vld [vmem:[#allocation2 + $0x2c] sm:$0xf]
    %v1111 = vld [vmem:[#allocation2 + $0x30] sm:$0xf]
    %v1112 = vld [vmem:[#allocation2 + $0x34] sm:$0xf]
    %v1113 = vld [vmem:[#allocation2 + $0x38] sm:$0xf]
    %v1114 = vld [vmem:[#allocation2 + $0x3c] sm:$0xf]
    %v1115 = vld [vmem:[#allocation2 + $0x40] sm:$0xf]
    %v1116 = vld [vmem:[#allocation2 + $0x44] sm:$0xf]
    %v1117 = vld [vmem:[#allocation2 + $0x48] sm:$0xf]
    %v1118 = vld [vmem:[#allocation2 + $0x4c] sm:$0xf]
    %v1119 = vld [vmem:[#allocation2 + $0x50] sm:$0xf]
    %v1120 = vld [vmem:[#allocation2 + $0x54] sm:$0xf]
    %v1121 = vld [vmem:[#allocation2 + $0x58] sm:$0xf]
    %v1122 = vld [vmem:[#allocation2 + $0x5c] sm:$0xf]
    %v1123 = vld [vmem:[#allocation2 + $0x60] sm:$0xf]
    %v1124 = vld [vmem:[#allocation2 + $0x64] sm:$0xf]
    %v1125 = vld [vmem:[#allocation2 + $0x68] sm:$0xf]
    %v1126 = vld [vmem:[#allocation2 + $0x6c] sm:$0xf]
    %v1127 = vld [vmem:[#allocation2 + $0x70] sm:$0xf]
    %v1128 = vld [vmem:[#allocation2 + $0x74] sm:$0xf]
    %v1129 = vld [vmem:[#allocation2 + $0x78] sm:$0xf]
    %v1130 = vld [vmem:[#allocation2 + $0x7c] sm:$0xf]
    %v1131 = vld [vmem:[#allocation2 + $0x80] sm:$0xf]
    %v1132 = vld [vmem:[#allocation2 + $0x84] sm:$0xf]
    %v1133 = vld [vmem:[#allocation2 + $0x88] sm:$0xf]
    %v1134 = vld [vmem:[#allocation2 + $0x8c] sm:$0xf]
    %v1135 = vld [vmem:[#allocation2 + $0x90] sm:$0xf]
    %v1136 = vld [vmem:[#allocation2 + $0x94] sm:$0xf]
    %v1137 = vld [vmem:[#allocation2 + $0x98] sm:$0xf]
    %v1138 = vld [vmem:[#allocation2 + $0x9c] sm:$0xf]
    %v1139 = vld [vmem:[#allocation2 + $0xa0] sm:$0xf]
    %v1140 = vld [vmem:[#allocation2 + $0xa4] sm:$0xf]
    %v1141 = vld [vmem:[#allocation2 + $0xa8] sm:$0xf]
    %v1142 = vld [vmem:[#allocation2 + $0xac] sm:$0xf]
    %v1143 = vld [vmem:[#allocation2 + $0xb0] sm:$0xf]
    %v1144 = vld [vmem:[#allocation2 + $0xb4] sm:$0xf]
    %v1145 = vld [vmem:[#allocation2 + $0xb8] sm:$0xf]
    %v1146 = vld [vmem:[#allocation2 + $0xbc] sm:$0xf]
    %v1147 = vld [vmem:[#allocation2 + $0xc0] sm:$0xf]
    %v1148 = vld [vmem:[#allocation2 + $0xc4] sm:$0xf]
    %v1149 = vld [vmem:[#allocation2 + $0xc8] sm:$0xf]
    %v1150 = vld [vmem:[#allocation2 + $0xcc] sm:$0xf]
    %v1151 = vld [vmem:[#allocation2 + $0xd0] sm:$0xf]
    %v1152 = vld [vmem:[#allocation2 + $0xd4] sm:$0xf]
    %v1153 = vld [vmem:[#allocation2 + $0xd8] sm:$0xf]
    %v1154 = vld [vmem:[#allocation2 + $0xdc] sm:$0xf]
    %v1155 = vld [vmem:[#allocation2 + $0xe0] sm:$0xf]
    %v1156 = vld [vmem:[#allocation2 + $0xe4] sm:$0xf]
    %v1157 = vld [vmem:[#allocation2 + $0xe8] sm:$0xf]
    %v1158 = vld [vmem:[#allocation2 + $0xec] sm:$0xf]
    %v1159 = vld [vmem:[#allocation2 + $0xf0] sm:$0xf]
    %v1160 = vld [vmem:[#allocation2 + $0xf4] sm:$0xf]
    %v1161 = vld [vmem:[#allocation2 + $0xf8] sm:$0xf]
    %v1162 = vld [vmem:[#allocation2 + $0xfc] sm:$0xf]
    %v1163 = vld [vmem:[#allocation2 + $0x100] sm:$0xf]
    %v1164 = vld [vmem:[#allocation2 + $0x104] sm:$0xf]
    %v1165 = vld [vmem:[#allocation2 + $0x108] sm:$0xf]
    %v1166 = vld [vmem:[#allocation2 + $0x10c] sm:$0xf]
    %v1167 = vld [vmem:[#allocation2 + $0x110] sm:$0xf]
    %v1168 = vld [vmem:[#allocation2 + $0x114] sm:$0xf]
    %v1169 = vld [vmem:[#allocation2 + $0x118] sm:$0xf]
    %v1170 = vld [vmem:[#allocation2 + $0x11c] sm:$0xf]
    %v1171 = vld [vmem:[#allocation2 + $0x120] sm:$0xf]
    %v1172 = vld [vmem:[#allocation2 + $0x124] sm:$0xf]
    %v1173 = vld [vmem:[#allocation2 + $0x128] sm:$0xf]
    %v1174 = vld [vmem:[#allocation2 + $0x12c] sm:$0xf]
    %v1175 = vld [vmem:[#allocation2 + $0x130] sm:$0xf]
    %v1176 = vld [vmem:[#allocation2 + $0x134] sm:$0xf]
    %v1177 = vld [vmem:[#allocation2 + $0x138] sm:$0xf]
    %v1178 = vld [vmem:[#allocation2 + $0x13c] sm:$0xf]
    %v1179 = vld [vmem:[#allocation2 + $0x140] sm:$0xf]
    %v1180 = vld [vmem:[#allocation2 + $0x144] sm:$0xf]
    %v1181 = vld [vmem:[#allocation2 + $0x148] sm:$0xf]
    %v1182 = vld [vmem:[#allocation2 + $0x14c] sm:$0xf]
    %v1183 = vld [vmem:[#allocation2 + $0x150] sm:$0xf]
    %v1184 = vld [vmem:[#allocation2 + $0x154] sm:$0xf]
    %v1185 = vld [vmem:[#allocation2 + $0x158] sm:$0xf]
    %v1186 = vld [vmem:[#allocation2 + $0x15c] sm:$0xf]
    %v1187 = vld [vmem:[#allocation2 + $0x160] sm:$0xf]
    %v1188 = vld [vmem:[#allocation2 + $0x164] sm:$0xf]
    %v1189 = vld [vmem:[#allocation2 + $0x168] sm:$0xf]
    %v1190 = vld [vmem:[#allocation2 + $0x16c] sm:$0xf]
    %v1191 = vld [vmem:[#allocation2 + $0x170] sm:$0xf]
    %v1192 = vld [vmem:[#allocation2 + $0x174] sm:$0xf]
    %v1193 = vld [vmem:[#allocation2 + $0x178] sm:$0xf]
    %v1194 = vld [vmem:[#allocation2 + $0x17c] sm:$0xf]
    %v1195 = vld [vmem:[#allocation2 + $0x180] sm:$0xf]
    %v1196 = vld [vmem:[#allocation2 + $0x184] sm:$0xf]
    %v1197 = vld [vmem:[#allocation2 + $0x188] sm:$0xf]
    %v1198 = vld [vmem:[#allocation2 + $0x18c] sm:$0xf]
    %v1199 = vld [vmem:[#allocation2 + $0x190] sm:$0xf]
    %v1200 = vld [vmem:[#allocation2 + $0x194] sm:$0xf]
    %v1201 = vld [vmem:[#allocation2 + $0x198] sm:$0xf]
    %v1202 = vld [vmem:[#allocation2 + $0x19c] sm:$0xf]
    %v1203 = vld [vmem:[#allocation2 + $0x1a0] sm:$0xf]
    %v1204 = vld [vmem:[#allocation2 + $0x1a4] sm:$0xf]
    %v1205 = vld [vmem:[#allocation2 + $0x1a8] sm:$0xf]
    %v1206 = vld [vmem:[#allocation2 + $0x1ac] sm:$0xf]
    %v1207 = vld [vmem:[#allocation2 + $0x1b0] sm:$0xf]
    %v1208 = vld [vmem:[#allocation2 + $0x1b4] sm:$0xf]
    %v1209 = vld [vmem:[#allocation2 + $0x1b8] sm:$0xf]
    %v1210 = vld [vmem:[#allocation2 + $0x1bc] sm:$0xf]
    %v1211 = vld [vmem:[#allocation2 + $0x1c0] sm:$0xf]
    %v1212 = vld [vmem:[#allocation2 + $0x1c4] sm:$0xf]
    %v1213 = vld [vmem:[#allocation2 + $0x1c8] sm:$0xf]
    %v1214 = vld [vmem:[#allocation2 + $0x1cc] sm:$0xf]
    %v1215 = vld [vmem:[#allocation2 + $0x1d0] sm:$0xf]
    %v1216 = vld [vmem:[#allocation2 + $0x1d4] sm:$0xf]
    %v1217 = vld [vmem:[#allocation2 + $0x1d8] sm:$0xf]
    %v1218 = vld [vmem:[#allocation2 + $0x1dc] sm:$0xf]
    %v1219 = vld [vmem:[#allocation2 + $0x1e0] sm:$0xf]
    %v1220 = vld [vmem:[#allocation2 + $0x1e4] sm:$0xf]
    %v1221 = vld [vmem:[#allocation2 + $0x1e8] sm:$0xf]
    %v1222 = vld [vmem:[#allocation2 + $0x1ec] sm:$0xf]
    %v1223 = vld [vmem:[#allocation2 + $0x1f0] sm:$0xf]
    %v1224 = vld [vmem:[#allocation2 + $0x1f4] sm:$0xf]
    %v1225 = vld [vmem:[#allocation2 + $0x1f8] sm:$0xf]
    %v1226 = vld [vmem:[#allocation2 + $0x1fc] sm:$0xf]
    %v1227 = vld [vmem:[%s2] sm:$0x3]
    %1229 = vset.pattern.permute.xlu0 0
    %1230 = vperm.xlu0 %1229, %v1227
    %v1231 = vpop.permute.xlu0 %1230
    %v1234 = vcombine.high %v1098, %v1098
    %v1236 = vunpack.c.l.s4 1966171168
    %v1237 = vunpack.c.0.s8 %v1236
    %v1238 = vlaneseq
    %v1239 = vshrl.u32 %v1238, 7
    %v1240 = vsub.s32 %v1237, %v1239
    %v1241 = vrot.slane %v1098, %v1240
    %v1243 = vunpack.c.l.s4 1966171168
    %v1244 = vunpack.c.0.s8 %v1243
    %v1245 = vlaneseq
    %v1246 = vshrl.u32 %v1245, 7
    %v1247 = vsub.s32 %v1244, %v1246
    %v1248 = vrot.slane %v1234, %v1247
    %v1249 = vcombine.high %v1241, %v1241
    %v1250 = vcombine.high %v1248, %v1248
    %v1252 = vunpack.c.l.s4 1966171168
    %v1253 = vunpack.c.0.s8 %v1252
    %v1254 = vlaneseq
    %v1255 = vshrl.u32 %v1254, 7
    %v1256 = vsub.s32 %v1253, %v1255
    %v1257 = vrot.slane %v1241, %v1256
    %v1259 = vunpack.c.l.s4 1966171168
    %v1260 = vunpack.c.0.s8 %v1259
    %v1261 = vlaneseq
    %v1262 = vshrl.u32 %v1261, 7
    %v1263 = vsub.s32 %v1260, %v1262
    %v1264 = vrot.slane %v1248, %v1263
    %v1266 = vunpack.c.l.s4 1966171168
    %v1267 = vunpack.c.0.s8 %v1266
    %v1268 = vlaneseq
    %v1269 = vshrl.u32 %v1268, 7
    %v1270 = vsub.s32 %v1267, %v1269
    %v1271 = vrot.slane %v1249, %v1270
    %v1273 = vunpack.c.l.s4 1966171168
    %v1274 = vunpack.c.0.s8 %v1273
    %v1275 = vlaneseq
    %v1276 = vshrl.u32 %v1275, 7
    %v1277 = vsub.s32 %v1274, %v1276
    %v1278 = vrot.slane %v1250, %v1277
    %v1279 = vcombine.high %v1257, %v1257
    %v1280 = vcombine.high %v1264, %v1264
    %v1281 = vcombine.high %v1271, %v1271
    %v1282 = vcombine.high %v1278, %v1278
    %v1419 = vunpack.c.l.b16 %v1099
    %v1420 = vunpack.c.l.b16 %v1100
    %v1421 = vunpack.c.l.b16 %v1101
    %v1422 = vunpack.c.l.b16 %v1102
    %v1423 = vunpack.c.l.b16 %v1103
    %v1424 = vunpack.c.l.b16 %v1104
    %v1425 = vunpack.c.l.b16 %v1105
    %v1426 = vunpack.c.l.b16 %v1106
    %v1427 = vunpack.c.l.b16 %v1107
    %v1428 = vunpack.c.l.b16 %v1108
    %v1429 = vunpack.c.l.b16 %v1109
    %v1430 = vunpack.c.l.b16 %v1110
    %v1431 = vunpack.c.l.b16 %v1111
    %v1432 = vunpack.c.l.b16 %v1112
    %v1433 = vunpack.c.l.b16 %v1113
    %v1434 = vunpack.c.l.b16 %v1114
    %v1435 = vunpack.c.l.b16 %v1115
    %v1436 = vunpack.c.l.b16 %v1116
    %v1437 = vunpack.c.l.b16 %v1117
    %v1438 = vunpack.c.l.b16 %v1118
    %v1439 = vunpack.c.l.b16 %v1119
    %v1440 = vunpack.c.l.b16 %v1120
    %v1441 = vunpack.c.l.b16 %v1121
    %v1442 = vunpack.c.l.b16 %v1122
    %v1443 = vunpack.c.l.b16 %v1123
    %v1444 = vunpack.c.l.b16 %v1124
    %v1445 = vunpack.c.l.b16 %v1125
    %v1446 = vunpack.c.l.b16 %v1126
    %v1447 = vunpack.c.l.b16 %v1127
    %v1448 = vunpack.c.l.b16 %v1128
    %v1449 = vunpack.c.l.b16 %v1129
    %v1450 = vunpack.c.l.b16 %v1130
    %v1451 = vunpack.c.l.b16 %v1131
    %v1452 = vunpack.c.l.b16 %v1132
    %v1453 = vunpack.c.l.b16 %v1133
    %v1454 = vunpack.c.l.b16 %v1134
    %v1455 = vunpack.c.l.b16 %v1135
    %v1456 = vunpack.c.l.b16 %v1136
    %v1457 = vunpack.c.l.b16 %v1137
    %v1458 = vunpack.c.l.b16 %v1138
    %v1459 = vunpack.c.l.b16 %v1139
    %v1460 = vunpack.c.l.b16 %v1140
    %v1461 = vunpack.c.l.b16 %v1141
    %v1462 = vunpack.c.l.b16 %v1142
    %v1463 = vunpack.c.l.b16 %v1143
    %v1464 = vunpack.c.l.b16 %v1144
    %v1465 = vunpack.c.l.b16 %v1145
    %v1466 = vunpack.c.l.b16 %v1146
    %v1467 = vunpack.c.l.b16 %v1147
    %v1468 = vunpack.c.l.b16 %v1148
    %v1469 = vunpack.c.l.b16 %v1149
    %v1470 = vunpack.c.l.b16 %v1150
    %v1471 = vunpack.c.l.b16 %v1151
    %v1472 = vunpack.c.l.b16 %v1152
    %v1473 = vunpack.c.l.b16 %v1153
    %v1474 = vunpack.c.l.b16 %v1154
    %v1475 = vunpack.c.l.b16 %v1155
    %v1476 = vunpack.c.l.b16 %v1156
    %v1477 = vunpack.c.l.b16 %v1157
    %v1478 = vunpack.c.l.b16 %v1158
    %v1479 = vunpack.c.l.b16 %v1159
    %v1480 = vunpack.c.l.b16 %v1160
    %v1481 = vunpack.c.l.b16 %v1161
    %v1482 = vunpack.c.l.b16 %v1162
    %v1483 = vunpack.c.l.b16 %v1163
    %v1484 = vunpack.c.l.b16 %v1164
    %v1485 = vunpack.c.l.b16 %v1165
    %v1486 = vunpack.c.l.b16 %v1166
    %v1487 = vunpack.c.l.b16 %v1167
    %v1488 = vunpack.c.l.b16 %v1168
    %v1489 = vunpack.c.l.b16 %v1169
    %v1490 = vunpack.c.l.b16 %v1170
    %v1491 = vunpack.c.l.b16 %v1171
    %v1492 = vunpack.c.l.b16 %v1172
    %v1493 = vunpack.c.l.b16 %v1173
    %v1494 = vunpack.c.l.b16 %v1174
    %v1495 = vunpack.c.l.b16 %v1175
    %v1496 = vunpack.c.l.b16 %v1176
    %v1497 = vunpack.c.l.b16 %v1177
    %v1498 = vunpack.c.l.b16 %v1178
    %v1499 = vunpack.c.l.b16 %v1179
    %v1500 = vunpack.c.l.b16 %v1180
    %v1501 = vunpack.c.l.b16 %v1181
    %v1502 = vunpack.c.l.b16 %v1182
    %v1503 = vunpack.c.l.b16 %v1183
    %v1504 = vunpack.c.l.b16 %v1184
    %v1505 = vunpack.c.l.b16 %v1185
    %v1506 = vunpack.c.l.b16 %v1186
    %v1507 = vunpack.c.l.b16 %v1187
    %v1508 = vunpack.c.l.b16 %v1188
    %v1509 = vunpack.c.l.b16 %v1189
    %v1510 = vunpack.c.l.b16 %v1190
    %v1511 = vunpack.c.l.b16 %v1191
    %v1512 = vunpack.c.l.b16 %v1192
    %v1513 = vunpack.c.l.b16 %v1193
    %v1514 = vunpack.c.l.b16 %v1194
    %v1515 = vunpack.c.l.b16 %v1195
    %v1516 = vunpack.c.l.b16 %v1196
    %v1517 = vunpack.c.l.b16 %v1197
    %v1518 = vunpack.c.l.b16 %v1198
    %v1519 = vunpack.c.l.b16 %v1199
    %v1520 = vunpack.c.l.b16 %v1200
    %v1521 = vunpack.c.l.b16 %v1201
    %v1522 = vunpack.c.l.b16 %v1202
    %v1523 = vunpack.c.l.b16 %v1203
    %v1524 = vunpack.c.l.b16 %v1204
    %v1525 = vunpack.c.l.b16 %v1205
    %v1526 = vunpack.c.l.b16 %v1206
    %v1527 = vunpack.c.l.b16 %v1207
    %v1528 = vunpack.c.l.b16 %v1208
    %v1529 = vunpack.c.l.b16 %v1209
    %v1530 = vunpack.c.l.b16 %v1210
    %v1531 = vunpack.c.l.b16 %v1211
    %v1532 = vunpack.c.l.b16 %v1212
    %v1533 = vunpack.c.l.b16 %v1213
    %v1534 = vunpack.c.l.b16 %v1214
    %v1535 = vunpack.c.l.b16 %v1215
    %v1536 = vunpack.c.l.b16 %v1216
    %v1537 = vunpack.c.l.b16 %v1217
    %v1538 = vunpack.c.l.b16 %v1218
    %v1539 = vunpack.c.l.b16 %v1219
    %v1540 = vunpack.c.l.b16 %v1220
    %v1541 = vunpack.c.l.b16 %v1221
    %v1542 = vunpack.c.l.b16 %v1222
    %v1543 = vunpack.c.l.b16 %v1223
    %v1544 = vunpack.c.l.b16 %v1224
    %v1545 = vunpack.c.l.b16 %v1225
    %v1546 = vunpack.c.l.b16 %v1226
    %v1547 = vpack.c.b16 %v1420, %v1419
    %v1548 = vpack.c.b16 %v1422, %v1421
    %v1549 = vpack.c.b16 %v1424, %v1423
    %v1550 = vpack.c.b16 %v1426, %v1425
    %v1551 = vpack.c.b16 %v1428, %v1427
    %v1552 = vpack.c.b16 %v1430, %v1429
    %v1553 = vpack.c.b16 %v1432, %v1431
    %v1554 = vpack.c.b16 %v1434, %v1433
    %v1555 = vpack.c.b16 %v1436, %v1435
    %v1556 = vpack.c.b16 %v1438, %v1437
    %v1557 = vpack.c.b16 %v1440, %v1439
    %v1558 = vpack.c.b16 %v1442, %v1441
    %v1559 = vpack.c.b16 %v1444, %v1443
    %v1560 = vpack.c.b16 %v1446, %v1445
    %v1561 = vpack.c.b16 %v1448, %v1447
    %v1562 = vpack.c.b16 %v1450, %v1449
    %v1563 = vpack.c.b16 %v1452, %v1451
    %v1564 = vpack.c.b16 %v1454, %v1453
    %v1565 = vpack.c.b16 %v1456, %v1455
    %v1566 = vpack.c.b16 %v1458, %v1457
    %v1567 = vpack.c.b16 %v1460, %v1459
    %v1568 = vpack.c.b16 %v1462, %v1461
    %v1569 = vpack.c.b16 %v1464, %v1463
    %v1570 = vpack.c.b16 %v1466, %v1465
    %v1571 = vpack.c.b16 %v1468, %v1467
    %v1572 = vpack.c.b16 %v1470, %v1469
    %v1573 = vpack.c.b16 %v1472, %v1471
    %v1574 = vpack.c.b16 %v1474, %v1473
    %v1575 = vpack.c.b16 %v1476, %v1475
    %v1576 = vpack.c.b16 %v1478, %v1477
    %v1577 = vpack.c.b16 %v1480, %v1479
    %v1578 = vpack.c.b16 %v1482, %v1481
    %v1579 = vpack.c.b16 %v1484, %v1483
    %v1580 = vpack.c.b16 %v1486, %v1485
    %v1581 = vpack.c.b16 %v1488, %v1487
    %v1582 = vpack.c.b16 %v1490, %v1489
    %v1583 = vpack.c.b16 %v1492, %v1491
    %v1584 = vpack.c.b16 %v1494, %v1493
    %v1585 = vpack.c.b16 %v1496, %v1495
    %v1586 = vpack.c.b16 %v1498, %v1497
    %v1587 = vpack.c.b16 %v1500, %v1499
    %v1588 = vpack.c.b16 %v1502, %v1501
    %v1589 = vpack.c.b16 %v1504, %v1503
    %v1590 = vpack.c.b16 %v1506, %v1505
    %v1591 = vpack.c.b16 %v1508, %v1507
    %v1592 = vpack.c.b16 %v1510, %v1509
    %v1593 = vpack.c.b16 %v1512, %v1511
    %v1594 = vpack.c.b16 %v1514, %v1513
    %v1595 = vpack.c.b16 %v1516, %v1515
    %v1596 = vpack.c.b16 %v1518, %v1517
    %v1597 = vpack.c.b16 %v1520, %v1519
    %v1598 = vpack.c.b16 %v1522, %v1521
    %v1599 = vpack.c.b16 %v1524, %v1523
    %v1600 = vpack.c.b16 %v1526, %v1525
    %v1601 = vpack.c.b16 %v1528, %v1527
    %v1602 = vpack.c.b16 %v1530, %v1529
    %v1603 = vpack.c.b16 %v1532, %v1531
    %v1604 = vpack.c.b16 %v1534, %v1533
    %v1605 = vpack.c.b16 %v1536, %v1535
    %v1606 = vpack.c.b16 %v1538, %v1537
    %v1607 = vpack.c.b16 %v1540, %v1539
    %v1608 = vpack.c.b16 %v1542, %v1541
    %v1609 = vpack.c.b16 %v1544, %v1543
    %v1610 = vpack.c.b16 %v1546, %v1545
    %1675 = vmatprep.subr.bf16.mxu0 0
    %1676 = vmatpush1.bf16.msra.mxu0 %v1554
    %1677 = vmatprep.subr.bf16.mxu0 0
    %1678 = vmatpush1.bf16.msra.mxu0 %v1553
    %1679 = vmatprep.subr.bf16.mxu0 0
    %1680 = vmatpush1.bf16.msra.mxu0 %v1552
    %1681 = vmatprep.subr.bf16.mxu0 0
    %1682 = vmatpush1.bf16.msra.mxu0 %v1551
    %1683 = vmatprep.subr.bf16.mxu0 0
    %1684 = vmatpush1.bf16.msra.mxu0 %v1550
    %1685 = vmatprep.subr.bf16.mxu0 0
    %1686 = vmatpush1.bf16.msra.mxu0 %v1549
    %1687 = vmatprep.subr.bf16.mxu0 0
    %1688 = vmatpush1.bf16.msra.mxu0 %v1548
    %1689 = vmatprep.subr.bf16.mxu0 0
    %1690 = vmatpush1.bf16.msra.mxu0 %v1547
    %1691 = vmatprep.subr.bf16.mxu0 0
    %1692 = vmatpush2.bf16.msra.mxu0 %v1562
    %1693 = vmatprep.subr.bf16.mxu0 0
    %1694 = vmatpush2.bf16.msra.mxu0 %v1561
    %1695 = vmatprep.subr.bf16.mxu0 0
    %1696 = vmatpush2.bf16.msra.mxu0 %v1560
    %1697 = vmatprep.subr.bf16.mxu0 0
    %1698 = vmatpush2.bf16.msra.mxu0 %v1559
    %1699 = vmatprep.subr.bf16.mxu0 0
    %1700 = vmatpush2.bf16.msra.mxu0 %v1558
    %1701 = vmatprep.subr.bf16.mxu0 0
    %1702 = vmatpush2.bf16.msra.mxu0 %v1557
    %1703 = vmatprep.subr.bf16.mxu0 0
    %1704 = vmatpush2.bf16.msra.mxu0 %v1556
    %1705 = vmatprep.subr.bf16.mxu0 0
    %1706 = vmatpush2.bf16.msra.mxu0 %v1555
    %1707 = vmatprep.mubr.bf16.mxu0 %v1271
    %1708 = vmatmul.mubr.bf16.gmra.mxu0 %v1257
    %v1709 = vpop.f32.mrf.mxu0
    %v1710 = vadd.f32 %v1231, %v1709
    %v1711 = vpop.f32.mrf.mxu0
    %v1712 = vpop.f32.mrf.mxu0
    %v1713 = vpop.f32.mrf.mxu0
    %1714 = vdwg.mxu0
    %1715 = vmatprep.subr.bf16.mxu0 0
    %1716 = vmatpush1.bf16.msra.mxu0 %v1570
    %1717 = vmatprep.subr.bf16.mxu0 0
    %1718 = vmatpush1.bf16.msra.mxu0 %v1569
    %1719 = vmatprep.subr.bf16.mxu0 0
    %1720 = vmatpush1.bf16.msra.mxu0 %v1568
    %1721 = vmatprep.subr.bf16.mxu0 0
    %1722 = vmatpush1.bf16.msra.mxu0 %v1567
    %1723 = vmatprep.subr.bf16.mxu0 0
    %1724 = vmatpush1.bf16.msra.mxu0 %v1566
    %1725 = vmatprep.subr.bf16.mxu0 0
    %1726 = vmatpush1.bf16.msra.mxu0 %v1565
    %1727 = vmatprep.subr.bf16.mxu0 0
    %1728 = vmatpush1.bf16.msra.mxu0 %v1564
    %1729 = vmatprep.subr.bf16.mxu0 0
    %1730 = vmatpush1.bf16.msra.mxu0 %v1563
    %1731 = vmatprep.subr.bf16.mxu0 0
    %1732 = vmatpush2.bf16.msra.mxu0 %v1578
    %1733 = vmatprep.subr.bf16.mxu0 0
    %1734 = vmatpush2.bf16.msra.mxu0 %v1577
    %1735 = vmatprep.subr.bf16.mxu0 0
    %1736 = vmatpush2.bf16.msra.mxu0 %v1576
    %1737 = vmatprep.subr.bf16.mxu0 0
    %1738 = vmatpush2.bf16.msra.mxu0 %v1575
    %1739 = vmatprep.subr.bf16.mxu0 0
    %1740 = vmatpush2.bf16.msra.mxu0 %v1574
    %1741 = vmatprep.subr.bf16.mxu0 0
    %1742 = vmatpush2.bf16.msra.mxu0 %v1573
    %1743 = vmatprep.subr.bf16.mxu0 0
    %1744 = vmatpush2.bf16.msra.mxu0 %v1572
    %1745 = vmatprep.subr.bf16.mxu0 0
    %1746 = vmatpush2.bf16.msra.mxu0 %v1571
    %1747 = vmatprep.mubr.bf16.mxu0 %v1281
    %1748 = vmatmul.mubr.bf16.gmra.mxu0 %v1279
    %v1749 = vpop.f32.mrf.mxu0
    %v1750 = vadd.f32 %v1710, %v1749
    %v1751 = vpop.f32.mrf.mxu0
    %v1752 = vpop.f32.mrf.mxu0
    %v1753 = vpop.f32.mrf.mxu0
    %1754 = vdwg.mxu0
    %1755 = vmatprep.subr.bf16.mxu0 0
    %1756 = vmatpush1.bf16.msra.mxu0 %v1586
    %1757 = vmatprep.subr.bf16.mxu0 0
    %1758 = vmatpush1.bf16.msra.mxu0 %v1585
    %1759 = vmatprep.subr.bf16.mxu0 0
    %1760 = vmatpush1.bf16.msra.mxu0 %v1584
    %1761 = vmatprep.subr.bf16.mxu0 0
    %1762 = vmatpush1.bf16.msra.mxu0 %v1583
    %1763 = vmatprep.subr.bf16.mxu0 0
    %1764 = vmatpush1.bf16.msra.mxu0 %v1582
    %1765 = vmatprep.subr.bf16.mxu0 0
    %1766 = vmatpush1.bf16.msra.mxu0 %v1581
    %1767 = vmatprep.subr.bf16.mxu0 0
    %1768 = vmatpush1.bf16.msra.mxu0 %v1580
    %1769 = vmatprep.subr.bf16.mxu0 0
    %1770 = vmatpush1.bf16.msra.mxu0 %v1579
    %1771 = vmatprep.subr.bf16.mxu0 0
    %1772 = vmatpush2.bf16.msra.mxu0 %v1594
    %1773 = vmatprep.subr.bf16.mxu0 0
    %1774 = vmatpush2.bf16.msra.mxu0 %v1593
    %1775 = vmatprep.subr.bf16.mxu0 0
    %1776 = vmatpush2.bf16.msra.mxu0 %v1592
    %1777 = vmatprep.subr.bf16.mxu0 0
    %1778 = vmatpush2.bf16.msra.mxu0 %v1591
    %1779 = vmatprep.subr.bf16.mxu0 0
    %1780 = vmatpush2.bf16.msra.mxu0 %v1590
    %1781 = vmatprep.subr.bf16.mxu0 0
    %1782 = vmatpush2.bf16.msra.mxu0 %v1589
    %1783 = vmatprep.subr.bf16.mxu0 0
    %1784 = vmatpush2.bf16.msra.mxu0 %v1588
    %1785 = vmatprep.subr.bf16.mxu0 0
    %1786 = vmatpush2.bf16.msra.mxu0 %v1587
    %1787 = vmatprep.mubr.bf16.mxu0 %v1278
    %1788 = vmatmul.mubr.bf16.gmra.mxu0 %v1264
    %v1789 = vpop.f32.mrf.mxu0
    %v1790 = vadd.f32 %v1750, %v1789
    %v1791 = vpop.f32.mrf.mxu0
    %v1792 = vpop.f32.mrf.mxu0
    %v1793 = vpop.f32.mrf.mxu0
    %1794 = vdwg.mxu0
    %1795 = vmatprep.subr.bf16.mxu0 0
    %1796 = vmatpush1.bf16.msra.mxu0 %v1602
    %1797 = vmatprep.subr.bf16.mxu0 0
    %1798 = vmatpush1.bf16.msra.mxu0 %v1601
    %1799 = vmatprep.subr.bf16.mxu0 0
    %1800 = vmatpush1.bf16.msra.mxu0 %v1600
    %1801 = vmatprep.subr.bf16.mxu0 0
    %1802 = vmatpush1.bf16.msra.mxu0 %v1599
    %1803 = vmatprep.subr.bf16.mxu0 0
    %1804 = vmatpush1.bf16.msra.mxu0 %v1598
    %1805 = vmatprep.subr.bf16.mxu0 0
    %1806 = vmatpush1.bf16.msra.mxu0 %v1597
    %1807 = vmatprep.subr.bf16.mxu0 0
    %1808 = vmatpush1.bf16.msra.mxu0 %v1596
    %1809 = vmatprep.subr.bf16.mxu0 0
    %1810 = vmatpush1.bf16.msra.mxu0 %v1595
    %1811 = vmatprep.subr.bf16.mxu0 0
    %1812 = vmatpush2.bf16.msra.mxu0 %v1610
    %1813 = vmatprep.subr.bf16.mxu0 0
    %1814 = vmatpush2.bf16.msra.mxu0 %v1609
    %1815 = vmatprep.subr.bf16.mxu0 0
    %1816 = vmatpush2.bf16.msra.mxu0 %v1608
    %1817 = vmatprep.subr.bf16.mxu0 0
    %1818 = vmatpush2.bf16.msra.mxu0 %v1607
    %1819 = vmatprep.subr.bf16.mxu0 0
    %1820 = vmatpush2.bf16.msra.mxu0 %v1606
    %1821 = vmatprep.subr.bf16.mxu0 0
    %1822 = vmatpush2.bf16.msra.mxu0 %v1605
    %1823 = vmatprep.subr.bf16.mxu0 0
    %1824 = vmatpush2.bf16.msra.mxu0 %v1604
    %1825 = vmatprep.subr.bf16.mxu0 0
    %1826 = vmatpush2.bf16.msra.mxu0 %v1603
    %1827 = vmatprep.mubr.bf16.mxu0 %v1282
    %1828 = vmatmul.mubr.bf16.gmra.mxu0 %v1280
    %v1829 = vpop.f32.mrf.mxu0
    %v1830 = vadd.f32 %v1790, %v1829
    %v1831 = vpop.f32.mrf.mxu0
    %v1832 = vpop.f32.mrf.mxu0
    %v1833 = vpop.f32.mrf.mxu0
    %1834 = vdwg.mxu0
    %vm1835 = vcmask 9216
    %v1836 = vsel %vm1835, %v1830, -inf
    %v1837 = vrot.slane %v1836, 4
    %v1838 = vmax.f32 %v1836, %v1837
    %v1839 = vrot.slane %v1838, 2
    %v1840 = vmax.f32 %v1838, %v1839
    %v1841 = vrot.slane %v1840, 1
    %v1842 = vmax.f32 %v1840, %v1841
    %v1843 = vsub.f32 %v1830, %v1842
    %v1844 = vmul.f32 %v1843, 1.442695
    %v1845 = vpow.pop %v1844
    %v1846 = vsel %vm1835, %v1845, 0.0
    %v1847 = vrot.slane %v1846, 4
    %v1848 = vadd.f32 %v1846, %v1847
    %v1849 = vrot.slane %v1848, 2
    %v1850 = vadd.f32 %v1848, %v1849
    %v1851 = vrot.slane %v1850, 1
    %v1852 = vadd.f32 %v1850, %v1851
    %v1853 = vlog2.pop %v1852
    %v1854 = vmul.f32 %v1853, 0.6931472
    %v1855 = vadd.f32 %v1842, %v1854
    %v1856 = vsub.f32 %v1830, %v1855
    %1857 = vst.msk [vmem:[#allocation3] sm:$0x3] %vm1835, %v1856
    // Predicated region
    $region14: #{tpu_custom_call.1} parent=1 // pred_check
      _
    $region15: #{tpu_custom_call.1} parent=1 // pred_check_branch
      %1859 = sbr.rel (0) target = $region17
    $region16: #{tpu_custom_call.1} parent=1 // pred_region
      %s1861 = ssub.s32 32, 32
      %1862 = vsyncadd [#allocation4], %s1861
      %s1864 = sshll.u32 [#allocation3], 4
      %s1865 = int_to_ptr.vmem [resolvable:$true] %s1864
      %1867 = dma.vmem_to_hbm [thread:$0]  %s1865, 32, %s3, [#allocation4]
    $region17: #{tpu_custom_call.1} parent=1 // pred_fallthru
      _
    // Predicated region
    $region18: #{tpu_custom_call.1} parent=1 // pred_check
      _
    $region19: #{tpu_custom_call.1} parent=1 // pred_check_branch
      %1869 = sbr.rel (0) target = $region21
    $region20: #{tpu_custom_call.1} parent=1 // pred_region
      %1870 = dma.done [#allocation4], 32
    $region21: #{tpu_custom_call.1} parent=1 // pred_fallthru
      _
    %1871 = vsyncpa [#allocation4], 1

</llo_original>
